<compile_context>
chip_gen: v7x
topology: tpu7x:2x2x1
jax: 0.10.0
libtpu: 0.0.40
codegen_flags: <defaults>
</compile_context>

<pallas_src>
import functools

import jax
import jax.numpy as jnp
import numpy as np
from jax.experimental import pallas as pl
from jax.experimental.pallas import tpu as pltpu

LANE = 128


def _round_up(x, m):
    return (x + m - 1) // m * m


# ------------------------------ fused kernel --------------------------------
def _moe_fused_kernel(xg_ref, gw_ref, nw_ref, noise_ref, xe_ref,
                      w_ref, b_ref,
                      out_ref, gate_out_ref,
                      *, n_experts, f_out_pad):
    # grid = (batch_tiles,)  -- every ref below is for the current batch tile;
    # gate/noise/expert weights are VMEM-resident (constant index_map).

    # ---- noisy top-2 gate (all f32, lane-dense E_pad = 128 wide) ----
    xg = xg_ref[...]                                                  # [TB, Fg]
    clean = jnp.dot(xg, gw_ref[...], preferred_element_type=jnp.float32)
    raw = jnp.dot(xg, nw_ref[...], preferred_element_type=jnp.float32)
    logits = clean + noise_ref[...] * jax.nn.softplus(raw)            # [TB, Ep]

    e_pad = logits.shape[-1]
    col = jax.lax.broadcasted_iota(jnp.int32, logits.shape, 1)
    # Padded columns must never be selected.
    logits = jnp.where(col < n_experts, logits, -jnp.inf)

    # top-1 (lowest index wins ties, matching torch.topk)
    max1 = jnp.max(logits, axis=-1, keepdims=True)
    idx1 = jnp.min(jnp.where(logits == max1, col, e_pad),
                   axis=-1, keepdims=True)
    mask1 = col == idx1
    # top-2
    masked = jnp.where(mask1, -jnp.inf, logits)
    max2 = jnp.max(masked, axis=-1, keepdims=True)
    idx2 = jnp.min(jnp.where(masked == max2, col, e_pad),
                   axis=-1, keepdims=True)
    mask2 = col == idx2

    # softmax over the two selected logits (max1 >= max2 -> shift by max1)
    e2 = jnp.exp(max2 - max1)
    inv = 1.0 / (1.0 + e2)
    gate = jnp.where(mask1, inv, 0.0) + jnp.where(mask2, e2 * inv, 0.0)

    gate_out_ref[...] = gate                                          # lane-dense store

    # ---- all experts in ONE MXU call, bf16 operands, f32 accumulation ----
    y_all = jnp.dot(xe_ref[...], w_ref[...],
                    preferred_element_type=jnp.float32) + b_ref[...]  # [TB, E*Fp]

    # Static unrolled expert combine: static lane slices are free addressing.
    acc = gate[:, 0:1] * y_all[:, 0:f_out_pad]
    for e in range(1, n_experts):
        acc = acc + gate[:, e:e + 1] * y_all[:, e * f_out_pad:(e + 1) * f_out_pad]

    out_ref[...] = acc


# ------------------------------ wrapper --------------------------------------
def _pick_tile(B, block_b):
    if block_b is not None:
        return block_b
    # v7x has 2 TensorCores/chip -> want >= 2 batch tiles for the "parallel"
    # axis; v5e/v6e (1 TC) prefer a single big tile (fewer grid steps).
    try:
        kind = jax.devices()[0].device_kind.lower()
    except Exception:  # pragma: no cover
        kind = ""
    if "v7" in kind and B % 16 == 0:
        return max(8, B // 2)
    return B


def make_moe_forward(gate_w, noise_w, expert_w, expert_b, *, block_b=None):
    """One-time parameter prep + jitted forward.

    gate_w / noise_w : torch layout [E, F_gate]
    expert_w         : torch Linear layout [E, F_out, F_in]
    expert_b         : [E, F_out]
    """
    E, f_out, f_in = expert_w.shape
    assert E >= 2, "SparseGate branch requires k=2 <= n_experts"
    f_gate = gate_w.shape[1]
    f_out_pad = _round_up(f_out, LANE)        # lane-dense expert output blocks
    e_pad = _round_up(E, LANE)                # lane-dense gate width

    # --- one-time prep (hoisted out of the per-forward path) ---
    gw_t = jnp.asarray(gate_w, jnp.float32).T                  # [Fg, E]
    nw_t = jnp.asarray(noise_w, jnp.float32).T                 # [Fg, E]
    gw_t = jnp.pad(gw_t, ((0, 0), (0, e_pad - E)))             # [Fg, Ep]
    nw_t = jnp.pad(nw_t, ((0, 0), (0, e_pad - E)))             # [Fg, Ep]

    w_t = jnp.transpose(jnp.asarray(expert_w, jnp.float32), (0, 2, 1))  # [E, Fin, Fout]
    b = jnp.asarray(expert_b, jnp.float32)                              # [E, Fout]
    if f_out_pad != f_out:
        w_t = jnp.pad(w_t, ((0, 0), (0, 0), (0, f_out_pad - f_out)))
        b = jnp.pad(b, ((0, 0), (0, f_out_pad - f_out)))
    # Fuse experts along the output/lane dim: [Fin, E*Fout_pad], bf16 to the MXU.
    w_cat = jnp.transpose(w_t, (1, 0, 2)).reshape(f_in, E * f_out_pad)
    w_cat = w_cat.astype(jnp.bfloat16)
    b_cat = b.reshape(1, E * f_out_pad)                                 # f32 bias

    # Resident-weight VMEM budget check (re-derive for v7x's 64 MiB VMEM).
    resident_bytes = (w_cat.size * 2 + b_cat.size * 4
                      + gw_t.size * 4 + nw_t.size * 4)
    # TODO(synk): fall back to a streamed per-expert grid axis (BlockSpec over E)
    # when resident weights exceed ~24 MiB; fine for the shapes exercised here.
    assert resident_bytes < 24 * 1024 * 1024, "expert weights too big for resident path"

    kernel = functools.partial(_moe_fused_kernel,
                               n_experts=E, f_out_pad=f_out_pad)

    @jax.jit
    def forward(x_gate, x_experts, noise):
        B = x_gate.shape[0]
        tb = _pick_tile(B, block_b)
        assert B % tb == 0 and tb % 8 == 0
        nb = B // tb

        xe = x_experts.astype(jnp.bfloat16)
        noise_p = jnp.pad(noise, ((0, 0), (0, e_pad - E)))              # zeros in pad

        flops = (2 * B * f_in * E * f_out_pad          # fused expert matmul
                 + 4 * B * f_gate * e_pad              # two gate matmuls
                 + 4 * B * E * f_out_pad)              # weighted combine
        bytes_accessed = (B * (f_gate * 4 + e_pad * 4 + f_in * 2        # inputs
                               + f_out_pad * 4 + e_pad * 4)             # outputs
                          + 2 * f_gate * e_pad * 4                      # gate weights
                          + f_in * E * f_out_pad * 2 + E * f_out_pad * 4)

        out_pad, gate_pad = pl.pallas_call(
            kernel,
            out_shape=(jax.ShapeDtypeStruct((B, f_out_pad), jnp.float32),
                       jax.ShapeDtypeStruct((B, e_pad), jnp.float32)),
            grid_spec=pltpu.PrefetchScalarGridSpec(
                num_scalar_prefetch=0,
                grid=(nb,),
                in_specs=[
                    pl.BlockSpec((tb, f_gate), lambda bi: (bi, 0)),           # x_gate
                    pl.BlockSpec((f_gate, e_pad), lambda bi: (0, 0)),         # Wg^T (resident)
                    pl.BlockSpec((f_gate, e_pad), lambda bi: (0, 0)),         # Wn^T (resident)
                    pl.BlockSpec((tb, e_pad), lambda bi: (bi, 0)),            # noise (padded)
                    pl.BlockSpec((tb, f_in), lambda bi: (bi, 0)),             # x_experts
                    pl.BlockSpec((f_in, E * f_out_pad), lambda bi: (0, 0)),   # W_cat (resident)
                    pl.BlockSpec((1, E * f_out_pad), lambda bi: (0, 0)),      # bias  (resident)
                ],
                out_specs=[
                    pl.BlockSpec((tb, f_out_pad), lambda bi: (bi, 0)),        # out
                    pl.BlockSpec((tb, e_pad), lambda bi: (bi, 0)),            # gate (lane-dense)
                ]),
            compiler_params=pltpu.CompilerParams(
                dimension_semantics=("parallel",),
                vmem_limit_bytes=32 * 1024 * 1024),
            cost_estimate=pl.CostEstimate(flops=flops,
                                          transcendentals=2 * B * e_pad + B,
                                          bytes_accessed=bytes_accessed),
        )(x_gate, gw_t, nw_t, noise_p, xe, w_cat, b_cat)

        out = out_pad if f_out_pad == f_out else out_pad[:, :f_out]
        return out, gate_pad[:, :E]

    return forward


# ------------------------------- reference -----------------------------------
def reference(x_gate, x_experts, gate_w, noise_w, expert_w, expert_b, noise):
    logits = x_gate @ gate_w.T + noise * jax.nn.softplus(x_gate @ noise_w.T)
    vals, idx = jax.lax.top_k(logits, 2)
    sm = jax.nn.softmax(vals, axis=-1)
    gate = jnp.zeros_like(logits)
    gate = gate.at[jnp.arange(logits.shape[0])[:, None], idx].set(sm)
    expert_out = jnp.einsum('bf,eof->beo', x_experts, expert_w) + expert_b[None]
    return jnp.einsum('be,beo->bo', gate, expert_out), gate


if __name__ == "__main__":
    # SparseGate branch (k = 2).  F_OUT is lane-dense (128); any other F_OUT is
    # padded up to a multiple of 128 transparently by the wrapper.
    B, F_GATE, F_IN, F_OUT, E = 128, 32, 32, 128, 4

    key = jax.random.PRNGKey(0)
    k1, k2, k3, k4, k5, k6, k7 = jax.random.split(key, 7)

    # Module init is zeros; use small random values of the same shapes so the
    # kernel path is exercised non-trivially.
    gate_w = 0.1 * jax.random.normal(k1, (E, F_GATE), jnp.float32)          # [E, Fg]
    noise_w = 0.1 * jax.random.normal(k2, (E, F_GATE), jnp.float32)         # [E, Fg]
    expert_w = 0.1 * jax.random.normal(k3, (E, F_OUT, F_IN), jnp.float32)   # torch layout
    expert_b = 0.1 * jax.random.normal(k4, (E, F_OUT), jnp.float32)

    x_gate = jax.random.normal(k5, (B, F_GATE), jnp.float32)
    x_experts = jax.random.normal(k6, (B, F_IN), jnp.float32)
    # torch's x.new_empty(...).normal_() -> deterministic JAX normal passed in.
    noise = jax.random.normal(k7, (B, E), jnp.float32)

    forward = make_moe_forward(gate_w, noise_w, expert_w, expert_b)
    out, gate = forward(x_gate, x_experts, noise)
    out = jax.block_until_ready(out)

    ref_out, ref_gate = reference(x_gate, x_experts, gate_w, noise_w,
                                  expert_w, expert_b, noise)

    np.testing.assert_allclose(np.asarray(gate), np.asarray(ref_gate),
                               rtol=1e-4, atol=1e-4)
    # expert path streams bf16 weights/activations (f32 accumulation)
    np.testing.assert_allclose(np.asarray(out), np.asarray(ref_out),
                               rtol=2e-2, atol=2e-2)

    print("KERNEL_OK")
</pallas_src>

<mosaic_0001>
module attributes {stable_mosaic.version = 11 : i64} {
  func.func @_moe_fused_kernel(%arg0: i32, %arg1: memref<128x32xf32, #tpu.memory_space<vmem>>, %arg2: memref<32x128xf32, #tpu.memory_space<vmem>>, %arg3: memref<32x128xf32, #tpu.memory_space<vmem>>, %arg4: memref<128x128xf32, #tpu.memory_space<vmem>>, %arg5: memref<128x32xbf16, #tpu.memory_space<vmem>>, %arg6: memref<32x512xbf16, #tpu.memory_space<vmem>>, %arg7: memref<1x512xf32, #tpu.memory_space<vmem>>, %arg8: memref<128x128xf32, #tpu.memory_space<vmem>>, %arg9: memref<128x128xf32, #tpu.memory_space<vmem>>) attributes {dimension_semantics = [#tpu.dimension_semantics<parallel>], iteration_bounds = array<i64: 1>, scalar_prefetch = 0 : i64, scratch_operands = 0 : i64, tpu.core_type = #tpu.core_type<tc>, window_params = [{transform_indices = @transform_0, window_bounds = array<i64: 128, 32>}, {pipeline_mode = #tpu.pipeline_mode<synchronous>, transform_indices = @transform_1, window_bounds = array<i64: 32, 128>}, {pipeline_mode = #tpu.pipeline_mode<synchronous>, transform_indices = @transform_2, window_bounds = array<i64: 32, 128>}, {transform_indices = @transform_3, window_bounds = array<i64: 128, 128>}, {transform_indices = @transform_4, window_bounds = array<i64: 128, 32>}, {pipeline_mode = #tpu.pipeline_mode<synchronous>, transform_indices = @transform_5, window_bounds = array<i64: 32, 512>}, {pipeline_mode = #tpu.pipeline_mode<synchronous>, transform_indices = @transform_6, window_bounds = array<i64: 1, 512>}, {transform_indices = @transform_7, window_bounds = array<i64: 128, 128>}, {transform_indices = @transform_8, window_bounds = array<i64: 128, 128>}]} {
    %c0 = arith.constant 0 : index
    %c0_0 = arith.constant 0 : index
    %0 = vector.load %arg1[%c0, %c0_0] : memref<128x32xf32, #tpu.memory_space<vmem>>, vector<128x32xf32>
    %c0_1 = arith.constant 0 : index
    %c0_2 = arith.constant 0 : index
    %1 = vector.load %arg2[%c0_1, %c0_2] : memref<32x128xf32, #tpu.memory_space<vmem>>, vector<32x128xf32>
    %cst = arith.constant dense<0.000000e+00> : vector<128x128xf32>
    %2 = tpu.matmul %0, %1, %cst {dimension_numbers = #tpu.dot_dimension_numbers<[1], [0], [0], [1], [0, 0, 1, 1], [], []>} : vector<128x32xf32>, vector<32x128xf32>, vector<128x128xf32> -> vector<128x128xf32>
    %c0_3 = arith.constant 0 : index
    %c0_4 = arith.constant 0 : index
    %3 = vector.load %arg3[%c0_3, %c0_4] : memref<32x128xf32, #tpu.memory_space<vmem>>, vector<32x128xf32>
    %cst_5 = arith.constant dense<0.000000e+00> : vector<128x128xf32>
    %4 = tpu.matmul %0, %3, %cst_5 {dimension_numbers = #tpu.dot_dimension_numbers<[1], [0], [0], [1], [0, 0, 1, 1], [], []>} : vector<128x32xf32>, vector<32x128xf32>, vector<128x128xf32> -> vector<128x128xf32>
    %c0_6 = arith.constant 0 : index
    %c0_7 = arith.constant 0 : index
    %5 = vector.load %arg4[%c0_6, %c0_7] : memref<128x128xf32, #tpu.memory_space<vmem>>, vector<128x128xf32>
    %cst_8 = arith.constant 0.000000e+00 : f32
    %6 = vector.broadcast %cst_8 : f32 to vector<128x128xf32>
    %7 = arith.maximumf %4, %6 : vector<128x128xf32>
    %8 = vector.broadcast %cst_8 : f32 to vector<128x128xf32>
    %9 = arith.subf %4, %8 : vector<128x128xf32>
    %10 = arith.cmpf one, %9, %9 : vector<128x128xf32>
    %11 = vector.broadcast %cst_8 : f32 to vector<128x128xf32>
    %12 = arith.addf %4, %11 : vector<128x128xf32>
    %13 = math.absf %9 : vector<128x128xf32>
    %cst_9 = arith.constant 0.000000e+00 : f32
    %14 = vector.broadcast %cst_9 : f32 to vector<128x128xf32>
    %15 = arith.subf %14, %13 : vector<128x128xf32>
    %16 = math.exp %15 : vector<128x128xf32>
    %17 = math.log1p %16 : vector<128x128xf32>
    %18 = arith.addf %7, %17 : vector<128x128xf32>
    %19 = arith.select %10, %12, %18 : vector<128x128xi1>, vector<128x128xf32>
    %20 = arith.mulf %5, %19 : vector<128x128xf32>
    %21 = arith.addf %2, %20 : vector<128x128xf32>
    %22 = tpu.iota {dimensions = array<i32: 1>} : vector<128x128xi32>
    %c4_i32 = arith.constant 4 : i32
    %23 = vector.broadcast %c4_i32 : i32 to vector<128x128xi32>
    %24 = arith.cmpi slt, %22, %23 : vector<128x128xi32>
    %cst_10 = arith.constant 0xFF800000 : f32
    %25 = vector.broadcast %cst_10 : f32 to vector<128x128xf32>
    %26 = arith.select %24, %21, %25 : vector<128x128xi1>, vector<128x128xf32>
    %cst_11 = arith.constant dense<0xFF800000> : vector<128xf32>
    %27 = vector.multi_reduction <maximumf>, %26, %cst_11 [1] : vector<128x128xf32> to vector<128xf32>
    %28 = vector.shape_cast %27 : vector<128xf32> to vector<128x1xf32>
    %29 = vector.broadcast %28 : vector<128x1xf32> to vector<128x128xf32>
    %30 = arith.cmpf oeq, %26, %29 : vector<128x128xf32>
    %c128_i32 = arith.constant 128 : i32
    %31 = vector.broadcast %c128_i32 : i32 to vector<128x128xi32>
    %32 = arith.select %30, %22, %31 : vector<128x128xi1>, vector<128x128xi32>
    %cst_12 = arith.constant dense<2147483647> : vector<128xi32>
    %33 = vector.multi_reduction <minsi>, %32, %cst_12 [1] : vector<128x128xi32> to vector<128xi32>
    %34 = vector.shape_cast %33 : vector<128xi32> to vector<128x1xi32>
    %35 = vector.broadcast %34 : vector<128x1xi32> to vector<128x128xi32>
    %36 = arith.cmpi eq, %22, %35 : vector<128x128xi32>
    %cst_13 = arith.constant 0xFF800000 : f32
    %37 = vector.broadcast %cst_13 : f32 to vector<128x128xf32>
    %38 = arith.select %36, %37, %26 : vector<128x128xi1>, vector<128x128xf32>
    %cst_14 = arith.constant dense<0xFF800000> : vector<128xf32>
    %39 = vector.multi_reduction <maximumf>, %38, %cst_14 [1] : vector<128x128xf32> to vector<128xf32>
    %40 = vector.shape_cast %39 : vector<128xf32> to vector<128x1xf32>
    %41 = vector.broadcast %40 : vector<128x1xf32> to vector<128x128xf32>
    %42 = arith.cmpf oeq, %38, %41 : vector<128x128xf32>
    %c128_i32_15 = arith.constant 128 : i32
    %43 = vector.broadcast %c128_i32_15 : i32 to vector<128x128xi32>
    %44 = arith.select %42, %22, %43 : vector<128x128xi1>, vector<128x128xi32>
    %cst_16 = arith.constant dense<2147483647> : vector<128xi32>
    %45 = vector.multi_reduction <minsi>, %44, %cst_16 [1] : vector<128x128xi32> to vector<128xi32>
    %46 = vector.shape_cast %45 : vector<128xi32> to vector<128x1xi32>
    %47 = vector.broadcast %46 : vector<128x1xi32> to vector<128x128xi32>
    %48 = arith.cmpi eq, %22, %47 : vector<128x128xi32>
    %49 = arith.subf %40, %28 : vector<128x1xf32>
    %50 = math.exp %49 : vector<128x1xf32>
    %cst_17 = arith.constant 1.000000e+00 : f32
    %51 = vector.broadcast %cst_17 : f32 to vector<128x1xf32>
    %52 = arith.addf %51, %50 : vector<128x1xf32>
    %cst_18 = arith.constant 1.000000e+00 : f32
    %53 = vector.broadcast %cst_18 : f32 to vector<128x1xf32>
    %54 = arith.divf %53, %52 : vector<128x1xf32>
    %cst_19 = arith.constant 0.000000e+00 : f32
    %55 = vector.shape_cast %54 : vector<128x1xf32> to vector<128x1xf32>
    %56 = vector.broadcast %55 : vector<128x1xf32> to vector<128x128xf32>
    %57 = vector.broadcast %cst_19 : f32 to vector<128x128xf32>
    %58 = arith.select %36, %56, %57 : vector<128x128xi1>, vector<128x128xf32>
    %59 = arith.mulf %50, %54 : vector<128x1xf32>
    %cst_20 = arith.constant 0.000000e+00 : f32
    %60 = vector.shape_cast %59 : vector<128x1xf32> to vector<128x1xf32>
    %61 = vector.broadcast %60 : vector<128x1xf32> to vector<128x128xf32>
    %62 = vector.broadcast %cst_20 : f32 to vector<128x128xf32>
    %63 = arith.select %48, %61, %62 : vector<128x128xi1>, vector<128x128xf32>
    %64 = arith.addf %58, %63 : vector<128x128xf32>
    %c0_21 = arith.constant 0 : index
    %c0_22 = arith.constant 0 : index
    %65 = vector.load %arg9[%c0_21, %c0_22] : memref<128x128xf32, #tpu.memory_space<vmem>>, vector<128x128xf32>
    tpu.vector_store %arg9[%c0_21, %c0_22], %64 {strides = array<i32>} : memref<128x128xf32, #tpu.memory_space<vmem>>, vector<128x128xf32>,
    %c0_23 = arith.constant 0 : index
    %c0_24 = arith.constant 0 : index
    %66 = vector.load %arg5[%c0_23, %c0_24] : memref<128x32xbf16, #tpu.memory_space<vmem>>, vector<128x32xbf16>
    %c0_25 = arith.constant 0 : index
    %c0_26 = arith.constant 0 : index
    %67 = vector.load %arg6[%c0_25, %c0_26] : memref<32x512xbf16, #tpu.memory_space<vmem>>, vector<32x512xbf16>
    %cst_27 = arith.constant dense<0.000000e+00> : vector<128x512xf32>
    %68 = tpu.matmul %66, %67, %cst_27 {dimension_numbers = #tpu.dot_dimension_numbers<[1], [0], [0], [1], [0, 0, 1, 1], [], []>} : vector<128x32xbf16>, vector<32x512xbf16>, vector<128x512xf32> -> vector<128x512xf32>
    %c0_28 = arith.constant 0 : index
    %c0_29 = arith.constant 0 : index
    %69 = vector.load %arg7[%c0_28, %c0_29] : memref<1x512xf32, #tpu.memory_space<vmem>>, vector<1x512xf32>
    %70 = vector.broadcast %69 : vector<1x512xf32> to vector<128x512xf32>
    %71 = arith.addf %68, %70 : vector<128x512xf32>
    %72 = vector.extract_strided_slice %64 {offsets = [0, 0], sizes = [128, 1], strides = [1, 1]} : vector<128x128xf32> to vector<128x1xf32>
    %73 = vector.extract_strided_slice %71 {offsets = [0, 0], sizes = [128, 128], strides = [1, 1]} : vector<128x512xf32> to vector<128x128xf32>
    %74 = vector.broadcast %72 : vector<128x1xf32> to vector<128x128xf32>
    %75 = arith.mulf %74, %73 : vector<128x128xf32>
    %76 = vector.extract_strided_slice %64 {offsets = [0, 1], sizes = [128, 1], strides = [1, 1]} : vector<128x128xf32> to vector<128x1xf32>
    %77 = vector.extract_strided_slice %71 {offsets = [0, 128], sizes = [128, 128], strides = [1, 1]} : vector<128x512xf32> to vector<128x128xf32>
    %78 = vector.broadcast %76 : vector<128x1xf32> to vector<128x128xf32>
    %79 = arith.mulf %78, %77 : vector<128x128xf32>
    %80 = arith.addf %75, %79 : vector<128x128xf32>
    %81 = vector.extract_strided_slice %64 {offsets = [0, 2], sizes = [128, 1], strides = [1, 1]} : vector<128x128xf32> to vector<128x1xf32>
    %82 = vector.extract_strided_slice %71 {offsets = [0, 256], sizes = [128, 128], strides = [1, 1]} : vector<128x512xf32> to vector<128x128xf32>
    %83 = vector.broadcast %81 : vector<128x1xf32> to vector<128x128xf32>
    %84 = arith.mulf %83, %82 : vector<128x128xf32>
    %85 = arith.addf %80, %84 : vector<128x128xf32>
    %86 = vector.extract_strided_slice %64 {offsets = [0, 3], sizes = [128, 1], strides = [1, 1]} : vector<128x128xf32> to vector<128x1xf32>
    %87 = vector.extract_strided_slice %71 {offsets = [0, 384], sizes = [128, 128], strides = [1, 1]} : vector<128x512xf32> to vector<128x128xf32>
    %88 = vector.broadcast %86 : vector<128x1xf32> to vector<128x128xf32>
    %89 = arith.mulf %88, %87 : vector<128x128xf32>
    %90 = arith.addf %85, %89 : vector<128x128xf32>
    %c0_30 = arith.constant 0 : index
    %c0_31 = arith.constant 0 : index
    %91 = vector.load %arg8[%c0_30, %c0_31] : memref<128x128xf32, #tpu.memory_space<vmem>>, vector<128x128xf32>
    tpu.vector_store %arg8[%c0_30, %c0_31], %90 {strides = array<i32>} : memref<128x128xf32, #tpu.memory_space<vmem>>, vector<128x128xf32>,
    return
  }
  func.func @transform_0(%arg0: i32) -> (i32, i32) {
    %c0_i32 = arith.constant 0 : i32
    %c0_i32_0 = arith.constant 0 : i32
    return %arg0, %c0_i32 : i32, i32
  }
  func.func @transform_1(%arg0: i32) -> (i32, i32) {
    %c0_i32 = arith.constant 0 : i32
    %c0_i32_0 = arith.constant 0 : i32
    %c0_i32_1 = arith.constant 0 : i32
    return %c0_i32, %c0_i32_0 : i32, i32
  }
  func.func @transform_2(%arg0: i32) -> (i32, i32) {
    %c0_i32 = arith.constant 0 : i32
    %c0_i32_0 = arith.constant 0 : i32
    %c0_i32_1 = arith.constant 0 : i32
    return %c0_i32, %c0_i32_0 : i32, i32
  }
  func.func @transform_3(%arg0: i32) -> (i32, i32) {
    %c0_i32 = arith.constant 0 : i32
    %c0_i32_0 = arith.constant 0 : i32
    return %arg0, %c0_i32 : i32, i32
  }
  func.func @transform_4(%arg0: i32) -> (i32, i32) {
    %c0_i32 = arith.constant 0 : i32
    %c0_i32_0 = arith.constant 0 : i32
    return %arg0, %c0_i32 : i32, i32
  }
  func.func @transform_5(%arg0: i32) -> (i32, i32) {
    %c0_i32 = arith.constant 0 : i32
    %c0_i32_0 = arith.constant 0 : i32
    %c0_i32_1 = arith.constant 0 : i32
    return %c0_i32, %c0_i32_0 : i32, i32
  }
  func.func @transform_6(%arg0: i32) -> (i32, i32) {
    %c0_i32 = arith.constant 0 : i32
    %c0_i32_0 = arith.constant 0 : i32
    %c0_i32_1 = arith.constant 0 : i32
    return %c0_i32, %c0_i32_0 : i32, i32
  }
  func.func @transform_7(%arg0: i32) -> (i32, i32) {
    %c0_i32 = arith.constant 0 : i32
    %c0_i32_0 = arith.constant 0 : i32
    return %arg0, %c0_i32 : i32, i32
  }
  func.func @transform_8(%arg0: i32) -> (i32, i32) {
    %c0_i32 = arith.constant 0 : i32
    %c0_i32_0 = arith.constant 0 : i32
    return %arg0, %c0_i32 : i32, i32
  }
}

</mosaic_0001>

<llo_original>
// kernel: forward.1
$region0: #{forward.1}
  #allocation0 [shape = 'u32[]', space=smem, size = 0x4, offset = 0x4, fixed_abs, tag = 'smem constant byte address 0x4 - core index']
  #allocation1 [shape = 'u32[144,128]{1,0:T(1,128)}', space=vmem, size = 0x12000, scoped, tag = 'internal scratch']
  %s0 = inlined_call_operand.vmem [shape: f32[128,32], index: 0, kind: input, shape index: {}]
  %s1 = inlined_call_operand.vmem [shape: f32[32,128], index: 1, kind: input, shape index: {}]
  %s2 = inlined_call_operand.vmem [shape: f32[32,128], index: 2, kind: input, shape index: {}]
  %s3 = inlined_call_operand.vmem [shape: f32[128,128], index: 3, kind: input, shape index: {}]
  %s4 = inlined_call_operand.vmem [shape: bf16[128,32], index: 4, kind: input, shape index: {}]
  %s5 = inlined_call_operand.vmem [shape: bf16[32,512], index: 5, kind: input, shape index: {}]
  %s6 = inlined_call_operand.vmem [shape: f32[1,512], index: 6, kind: input, shape index: {}]
  %s7 = inlined_call_operand.hbm [shape: f32[128,128], index: 7, kind: output, shape index: {0}]
  %s8 = inlined_call_operand.vmem [shape: f32[128,128], index: 8, kind: output, shape index: {1}]
  %9 = xla_tuple %s7, %s8
  %s10 = sld [smem:[#allocation0]]
  $region46: #{forward.1} parent=0
    _
  %s12 = ssub.s32 1, %s10
  %s13 = scalar_select 0, %s12, %s10
  $region1: #{forward.1} parent=0
    #allocation2 [shape = 'u8[65536]{0}', space=vmem, size = 0x10000, scoped, tag = 'output window, operand 0, single buffered']
    #allocation3 [shape = 's32[1]{0}', space=sflag, size = 0x4, scoped, tag = 'scoped memory for forward.1']
    %14 = vsyncpa [#allocation3], 0
    // Predicated region
    $region2: #{forward.1} parent=1 // pred_check
      _
    $region3: #{forward.1} parent=1 // pred_check_branch
      %16 = sbr.rel (0) target = $region5
    $region4: #{forward.1} parent=1 // pred_region
      _
    $region5: #{forward.1} parent=1 // pred_fallthru
      _
    // Predicated region
    $region6: #{forward.1} parent=1 // pred_check
      _
    $region7: #{forward.1} parent=1 // pred_check_branch
      %18 = sbr.rel (0) target = $region9
    $region8: #{forward.1} parent=1 // pred_region
      _
    $region9: #{forward.1} parent=1 // pred_fallthru
      _
    // Predicated region
    $region10: #{forward.1} parent=1 // pred_check
      _
    $region11: #{forward.1} parent=1 // pred_check_branch
      %20 = sbr.rel (0) target = $region13
    $region12: #{forward.1} parent=1 // pred_region
      _
    $region13: #{forward.1} parent=1 // pred_fallthru
      _
    // Predicated region
    $region14: #{forward.1} parent=1 // pred_check
      _
    $region15: #{forward.1} parent=1 // pred_check_branch
      %22 = sbr.rel (0) target = $region17
    $region16: #{forward.1} parent=1 // pred_region
      _
    $region17: #{forward.1} parent=1 // pred_fallthru
      _
    // Predicated region
    $region18: #{forward.1} parent=1 // pred_check
      _
    $region19: #{forward.1} parent=1 // pred_check_branch
      %24 = sbr.rel (0) target = $region21
    $region20: #{forward.1} parent=1 // pred_region
      _
    $region21: #{forward.1} parent=1 // pred_fallthru
      _
    // Predicated region
    $region22: #{forward.1} parent=1 // pred_check
      _
    $region23: #{forward.1} parent=1 // pred_check_branch
      %26 = sbr.rel (0) target = $region25
    $region24: #{forward.1} parent=1 // pred_region
      _
    $region25: #{forward.1} parent=1 // pred_fallthru
      _
    // Predicated region
    $region26: #{forward.1} parent=1 // pred_check
      _
    $region27: #{forward.1} parent=1 // pred_check_branch
      %28 = sbr.rel (0) target = $region29
    $region28: #{forward.1} parent=1 // pred_region
      _
    $region29: #{forward.1} parent=1 // pred_fallthru
      _
    %v30 = vld [vmem:[%s0] sm:$0xff]
    %v31 = vld [vmem:[%s0 + $0x8] sm:$0xff]
    %v32 = vld [vmem:[%s0 + $0x10] sm:$0xff]
    %v33 = vld [vmem:[%s0 + $0x18] sm:$0xff]
    %v34 = vld [vmem:[%s0 + $0x20] sm:$0xff]
    %v35 = vld [vmem:[%s0 + $0x28] sm:$0xff]
    %v36 = vld [vmem:[%s0 + $0x30] sm:$0xff]
    %v37 = vld [vmem:[%s0 + $0x38] sm:$0xff]
    %v38 = vld [vmem:[%s0 + $0x40] sm:$0xff]
    %v39 = vld [vmem:[%s0 + $0x48] sm:$0xff]
    %v40 = vld [vmem:[%s0 + $0x50] sm:$0xff]
    %v41 = vld [vmem:[%s0 + $0x58] sm:$0xff]
    %v42 = vld [vmem:[%s0 + $0x60] sm:$0xff]
    %v43 = vld [vmem:[%s0 + $0x68] sm:$0xff]
    %v44 = vld [vmem:[%s0 + $0x70] sm:$0xff]
    %v45 = vld [vmem:[%s0 + $0x78] sm:$0xff]
    %v46 = vld [vmem:[%s1] sm:$0xff]
    %v47 = vld [vmem:[%s1 + $0x8] sm:$0xff]
    %v48 = vld [vmem:[%s1 + $0x10] sm:$0xff]
    %v49 = vld [vmem:[%s1 + $0x18] sm:$0xff]
    %v50 = vld [vmem:[%s2] sm:$0xff]
    %v51 = vld [vmem:[%s2 + $0x8] sm:$0xff]
    %v52 = vld [vmem:[%s2 + $0x10] sm:$0xff]
    %v53 = vld [vmem:[%s2 + $0x18] sm:$0xff]
    %vm54 = vcmask 261120
    %v56 = vsel %vm54, %v30, 0
    %v59 = vsel %vm54, %v31, 0
    %v62 = vsel %vm54, %v32, 0
    %v65 = vsel %vm54, %v33, 0
    %v68 = vsel %vm54, %v34, 0
    %v71 = vsel %vm54, %v35, 0
    %v74 = vsel %vm54, %v36, 0
    %v77 = vsel %vm54, %v37, 0
    %v80 = vsel %vm54, %v38, 0
    %v83 = vsel %vm54, %v39, 0
    %v86 = vsel %vm54, %v40, 0
    %v89 = vsel %vm54, %v41, 0
    %v92 = vsel %vm54, %v42, 0
    %v95 = vsel %vm54, %v43, 0
    %v98 = vsel %vm54, %v44, 0
    %v101 = vsel %vm54, %v45, 0
    %103 = vmatprep.subr.mxu0 0.0
    %104 = vmatpush1.msra.mxu0 %v50
    %105 = vmatprep.subr.mxu0 0.0
    %106 = vmatpush1.msra.mxu0 %v51
    %107 = vmatprep.subr.mxu0 0.0
    %108 = vmatpush1.msra.mxu0 %v52
    %109 = vmatprep.subr.mxu0 0.0
    %110 = vmatpush1.msra.mxu0 %v53
    %111 = vmatprep.subr.mxu0 0.0
    %112 = vmatpush1.msra.mxu0 0.0
    %113 = vmatprep.subr.mxu0 0.0
    %114 = vmatpush1.msra.mxu0 0.0
    %115 = vmatprep.subr.mxu0 0.0
    %116 = vmatpush1.msra.mxu0 0.0
    %117 = vmatprep.subr.mxu0 0.0
    %118 = vmatpush1.msra.mxu0 0.0
    %119 = vmatprep.subr.mxu0 0.0
    %120 = vmatpush1.msra.mxu0 0.0
    %121 = vmatprep.subr.mxu0 0.0
    %122 = vmatpush1.msra.mxu0 0.0
    %123 = vmatprep.subr.mxu0 0.0
    %124 = vmatpush1.msra.mxu0 0.0
    %125 = vmatprep.subr.mxu0 0.0
    %126 = vmatpush1.msra.mxu0 0.0
    %127 = vmatprep.subr.mxu0 0.0
    %128 = vmatpush1.msra.mxu0 0.0
    %129 = vmatprep.subr.mxu0 0.0
    %130 = vmatpush1.msra.mxu0 0.0
    %131 = vmatprep.subr.mxu0 0.0
    %132 = vmatpush1.msra.mxu0 0.0
    %133 = vmatprep.subr.mxu0 0.0
    %134 = vmatpush1.msra.mxu0 0.0
    %135 = vmatprep.subr.mxu0 0.0
    %136 = vmatpush1.msra.mxu0 0.0
    %137 = vmatprep.subr.mxu0 0.0
    %138 = vmatpush1.msra.mxu0 0.0
    %139 = vmatprep.subr.mxu0 0.0
    %140 = vmatpush1.msra.mxu0 0.0
    %141 = vmatprep.subr.mxu0 0.0
    %142 = vmatpush1.msra.mxu0 0.0
    %143 = vmatprep.subr.mxu0 0.0
    %144 = vmatpush1.msra.mxu0 0.0
    %145 = vmatprep.subr.mxu0 0.0
    %146 = vmatpush1.msra.mxu0 0.0
    %147 = vmatprep.subr.mxu0 0.0
    %148 = vmatpush1.msra.mxu0 0.0
    %149 = vmatprep.subr.mxu0 0.0
    %150 = vmatpush1.msra.mxu0 0.0
    %151 = vmatprep.subr.mxu0 0.0
    %152 = vmatpush1.msra.mxu0 0.0
    %153 = vmatprep.subr.mxu0 0.0
    %154 = vmatpush1.msra.mxu0 0.0
    %155 = vmatprep.subr.mxu0 0.0
    %156 = vmatpush1.msra.mxu0 0.0
    %157 = vmatprep.subr.mxu0 0.0
    %158 = vmatpush1.msra.mxu0 0.0
    %159 = vmatprep.subr.mxu0 0.0
    %160 = vmatpush1.msra.mxu0 0.0
    %161 = vmatprep.subr.mxu0 0.0
    %162 = vmatpush1.msra.mxu0 0.0
    %163 = vmatprep.subr.mxu0 0.0
    %164 = vmatpush1.msra.mxu0 0.0
    %165 = vmatprep.subr.mxu0 0.0
    %166 = vmatpush1.msra.mxu0 0.0
    %167 = vmatprep.mubr.f32.mxu0 0.0
    %168 = vmatmul.mubr.f32.gmra.mrb[0].mxu0 %v56
    %v169 = vpop.f32.mrb[0].mxu0
    %v170 = vadd.f32 0.0, %v169
    %v171 = vpop.f32.mrb[0].mxu0
    %172 = vmatprep.mubr.f32.mxu0 0.0
    %173 = vmatmul.mubr.f32.gmra.mrb[0].mxu0 %v59
    %v174 = vpop.f32.mrb[0].mxu0
    %v175 = vadd.f32 0.0, %v174
    %v176 = vpop.f32.mrb[0].mxu0
    %177 = vmatprep.mubr.f32.mxu0 0.0
    %178 = vmatmul.mubr.f32.gmra.mrb[0].mxu0 %v62
    %v179 = vpop.f32.mrb[0].mxu0
    %v180 = vadd.f32 0.0, %v179
    %v181 = vpop.f32.mrb[0].mxu0
    %182 = vmatprep.mubr.f32.mxu0 0.0
    %183 = vmatmul.mubr.f32.gmra.mrb[0].mxu0 %v65
    %v184 = vpop.f32.mrb[0].mxu0
    %v185 = vadd.f32 0.0, %v184
    %v186 = vpop.f32.mrb[0].mxu0
    %187 = vmatprep.mubr.f32.mxu0 0.0
    %188 = vmatmul.mubr.f32.gmra.mrb[0].mxu0 %v68
    %v189 = vpop.f32.mrb[0].mxu0
    %v190 = vadd.f32 0.0, %v189
    %v191 = vpop.f32.mrb[0].mxu0
    %192 = vmatprep.mubr.f32.mxu0 0.0
    %193 = vmatmul.mubr.f32.gmra.mrb[0].mxu0 %v71
    %v194 = vpop.f32.mrb[0].mxu0
    %v195 = vadd.f32 0.0, %v194
    %v196 = vpop.f32.mrb[0].mxu0
    %197 = vmatprep.mubr.f32.mxu0 0.0
    %198 = vmatmul.mubr.f32.gmra.mrb[0].mxu0 %v74
    %v199 = vpop.f32.mrb[0].mxu0
    %v200 = vadd.f32 0.0, %v199
    %v201 = vpop.f32.mrb[0].mxu0
    %202 = vmatprep.mubr.f32.mxu0 0.0
    %203 = vmatmul.mubr.f32.gmra.mrb[0].mxu0 %v77
    %v204 = vpop.f32.mrb[0].mxu0
    %v205 = vadd.f32 0.0, %v204
    %v206 = vpop.f32.mrb[0].mxu0
    %207 = vmatprep.mubr.f32.mxu0 0.0
    %208 = vmatmul.mubr.f32.gmra.mrb[0].mxu0 %v80
    %v209 = vpop.f32.mrb[0].mxu0
    %v210 = vadd.f32 0.0, %v209
    %v211 = vpop.f32.mrb[0].mxu0
    %212 = vmatprep.mubr.f32.mxu0 0.0
    %213 = vmatmul.mubr.f32.gmra.mrb[0].mxu0 %v83
    %v214 = vpop.f32.mrb[0].mxu0
    %v215 = vadd.f32 0.0, %v214
    %v216 = vpop.f32.mrb[0].mxu0
    %217 = vmatprep.mubr.f32.mxu0 0.0
    %218 = vmatmul.mubr.f32.gmra.mrb[0].mxu0 %v86
    %v219 = vpop.f32.mrb[0].mxu0
    %v220 = vadd.f32 0.0, %v219
    %v221 = vpop.f32.mrb[0].mxu0
    %222 = vmatprep.mubr.f32.mxu0 0.0
    %223 = vmatmul.mubr.f32.gmra.mrb[0].mxu0 %v89
    %v224 = vpop.f32.mrb[0].mxu0
    %v225 = vadd.f32 0.0, %v224
    %v226 = vpop.f32.mrb[0].mxu0
    %227 = vmatprep.mubr.f32.mxu0 0.0
    %228 = vmatmul.mubr.f32.gmra.mrb[0].mxu0 %v92
    %v229 = vpop.f32.mrb[0].mxu0
    %v230 = vadd.f32 0.0, %v229
    %v231 = vpop.f32.mrb[0].mxu0
    %232 = vmatprep.mubr.f32.mxu0 0.0
    %233 = vmatmul.mubr.f32.gmra.mrb[0].mxu0 %v95
    %v234 = vpop.f32.mrb[0].mxu0
    %v235 = vadd.f32 0.0, %v234
    %v236 = vpop.f32.mrb[0].mxu0
    %237 = vmatprep.mubr.f32.mxu0 0.0
    %238 = vmatmul.mubr.f32.gmra.mrb[0].mxu0 %v98
    %v239 = vpop.f32.mrb[0].mxu0
    %v240 = vadd.f32 0.0, %v239
    %v241 = vpop.f32.mrb[0].mxu0
    %242 = vmatprep.mubr.f32.mxu0 0.0
    %243 = vmatmul.mubr.f32.gmra.mrb[0].mxu0 %v101
    %v244 = vpop.f32.mrb[0].mxu0
    %v245 = vadd.f32 0.0, %v244
    %v246 = vpop.f32.mrb[0].mxu0
    %247 = vdwg.mxu0
    %v248 = vld [vmem:[%s3] sm:$0xff]
    %v249 = vld [vmem:[%s3 + $0x8] sm:$0xff]
    %v250 = vld [vmem:[%s3 + $0x10] sm:$0xff]
    %v251 = vld [vmem:[%s3 + $0x18] sm:$0xff]
    %v252 = vld [vmem:[%s3 + $0x20] sm:$0xff]
    %v253 = vld [vmem:[%s3 + $0x28] sm:$0xff]
    %v254 = vld [vmem:[%s3 + $0x30] sm:$0xff]
    %v255 = vld [vmem:[%s3 + $0x38] sm:$0xff]
    %v256 = vld [vmem:[%s3 + $0x40] sm:$0xff]
    %v257 = vld [vmem:[%s3 + $0x48] sm:$0xff]
    %v258 = vld [vmem:[%s3 + $0x50] sm:$0xff]
    %v259 = vld [vmem:[%s3 + $0x58] sm:$0xff]
    %v260 = vld [vmem:[%s3 + $0x60] sm:$0xff]
    %v261 = vld [vmem:[%s3 + $0x68] sm:$0xff]
    %v262 = vld [vmem:[%s3 + $0x70] sm:$0xff]
    %v263 = vld [vmem:[%s3 + $0x78] sm:$0xff]
    %v264 = vmax.f32 %v170, 0.0
    %v265 = vmax.f32 %v175, 0.0
    %v266 = vmax.f32 %v180, 0.0
    %v267 = vmax.f32 %v185, 0.0
    %v268 = vmax.f32 %v190, 0.0
    %v269 = vmax.f32 %v195, 0.0
    %v270 = vmax.f32 %v200, 0.0
    %v271 = vmax.f32 %v205, 0.0
    %v272 = vmax.f32 %v210, 0.0
    %v273 = vmax.f32 %v215, 0.0
    %v274 = vmax.f32 %v220, 0.0
    %v275 = vmax.f32 %v225, 0.0
    %v276 = vmax.f32 %v230, 0.0
    %v277 = vmax.f32 %v235, 0.0
    %v278 = vmax.f32 %v240, 0.0
    %v279 = vmax.f32 %v245, 0.0
    %vm280 = vcmp.ne.f32.partialorder %v170, %v170
    %vm281 = vcmp.ne.f32.partialorder %v175, %v175
    %vm282 = vcmp.ne.f32.partialorder %v180, %v180
    %vm283 = vcmp.ne.f32.partialorder %v185, %v185
    %vm284 = vcmp.ne.f32.partialorder %v190, %v190
    %vm285 = vcmp.ne.f32.partialorder %v195, %v195
    %vm286 = vcmp.ne.f32.partialorder %v200, %v200
    %vm287 = vcmp.ne.f32.partialorder %v205, %v205
    %vm288 = vcmp.ne.f32.partialorder %v210, %v210
    %vm289 = vcmp.ne.f32.partialorder %v215, %v215
    %vm290 = vcmp.ne.f32.partialorder %v220, %v220
    %vm291 = vcmp.ne.f32.partialorder %v225, %v225
    %vm292 = vcmp.ne.f32.partialorder %v230, %v230
    %vm293 = vcmp.ne.f32.partialorder %v235, %v235
    %vm294 = vcmp.ne.f32.partialorder %v240, %v240
    %vm295 = vcmp.ne.f32.partialorder %v245, %v245
    %v296 = vadd.f32 %v170, 0.0
    %v297 = vadd.f32 %v175, 0.0
    %v298 = vadd.f32 %v180, 0.0
    %v299 = vadd.f32 %v185, 0.0
    %v300 = vadd.f32 %v190, 0.0
    %v301 = vadd.f32 %v195, 0.0
    %v302 = vadd.f32 %v200, 0.0
    %v303 = vadd.f32 %v205, 0.0
    %v304 = vadd.f32 %v210, 0.0
    %v305 = vadd.f32 %v215, 0.0
    %v306 = vadd.f32 %v220, 0.0
    %v307 = vadd.f32 %v225, 0.0
    %v308 = vadd.f32 %v230, 0.0
    %v309 = vadd.f32 %v235, 0.0
    %v310 = vadd.f32 %v240, 0.0
    %v311 = vadd.f32 %v245, 0.0
    %v312 = vand.u32 2147483647, %v170
    %v313 = vand.u32 2147483647, %v175
    %v314 = vand.u32 2147483647, %v180
    %v315 = vand.u32 2147483647, %v185
    %v316 = vand.u32 2147483647, %v190
    %v317 = vand.u32 2147483647, %v195
    %v318 = vand.u32 2147483647, %v200
    %v319 = vand.u32 2147483647, %v205
    %v320 = vand.u32 2147483647, %v210
    %v321 = vand.u32 2147483647, %v215
    %v322 = vand.u32 2147483647, %v220
    %v323 = vand.u32 2147483647, %v225
    %v324 = vand.u32 2147483647, %v230
    %v325 = vand.u32 2147483647, %v235
    %v326 = vand.u32 2147483647, %v240
    %v327 = vand.u32 2147483647, %v245
    %v328 = vsub.f32 0.0, %v312
    %v329 = vsub.f32 0.0, %v313
    %v330 = vsub.f32 0.0, %v314
    %v331 = vsub.f32 0.0, %v315
    %v332 = vsub.f32 0.0, %v316
    %v333 = vsub.f32 0.0, %v317
    %v334 = vsub.f32 0.0, %v318
    %v335 = vsub.f32 0.0, %v319
    %v336 = vsub.f32 0.0, %v320
    %v337 = vsub.f32 0.0, %v321
    %v338 = vsub.f32 0.0, %v322
    %v339 = vsub.f32 0.0, %v323
    %v340 = vsub.f32 0.0, %v324
    %v341 = vsub.f32 0.0, %v325
    %v342 = vsub.f32 0.0, %v326
    %v343 = vsub.f32 0.0, %v327
    %v344 = vmul.f32 %v328, 1.442695
    %v345 = vpow.pop %v344
    %v346 = vmul.f32 %v329, 1.442695
    %v347 = vpow.pop %v346
    %v348 = vmul.f32 %v330, 1.442695
    %v349 = vpow.pop %v348
    %v350 = vmul.f32 %v331, 1.442695
    %v351 = vpow.pop %v350
    %v352 = vmul.f32 %v332, 1.442695
    %v353 = vpow.pop %v352
    %v354 = vmul.f32 %v333, 1.442695
    %v355 = vpow.pop %v354
    %v356 = vmul.f32 %v334, 1.442695
    %v357 = vpow.pop %v356
    %v358 = vmul.f32 %v335, 1.442695
    %v359 = vpow.pop %v358
    %v360 = vmul.f32 %v336, 1.442695
    %v361 = vpow.pop %v360
    %v362 = vmul.f32 %v337, 1.442695
    %v363 = vpow.pop %v362
    %v364 = vmul.f32 %v338, 1.442695
    %v365 = vpow.pop %v364
    %v366 = vmul.f32 %v339, 1.442695
    %v367 = vpow.pop %v366
    %v368 = vmul.f32 %v340, 1.442695
    %v369 = vpow.pop %v368
    %v370 = vmul.f32 %v341, 1.442695
    %v371 = vpow.pop %v370
    %v372 = vmul.f32 %v342, 1.442695
    %v373 = vpow.pop %v372
    %v374 = vmul.f32 %v343, 1.442695
    %v375 = vpow.pop %v374
    %v376 = vadd.f32 %v345, 1.0
    %v377 = vlog2.pop %v376
    %v378 = vmul.f32 %v377, 0.6931472
    %v379 = vmul.f32 -0.5, %v345
    %v380 = vadd.f32 %v379, 1.0
    %v381 = vmul.f32 %v380, %v345
    %v382 = vand.u32 2147483647, %v345
    %vm383 = vcmp.lt.f32.partialorder %v382, 0.0004427343
    %v384 = vsel %vm383, %v381, %v378
    %v385 = vadd.f32 %v347, 1.0
    %v386 = vlog2.pop %v385
    %v387 = vmul.f32 %v386, 0.6931472
    %v388 = vmul.f32 -0.5, %v347
    %v389 = vadd.f32 %v388, 1.0
    %v390 = vmul.f32 %v389, %v347
    %v391 = vand.u32 2147483647, %v347
    %vm392 = vcmp.lt.f32.partialorder %v391, 0.0004427343
    %v393 = vsel %vm392, %v390, %v387
    %v394 = vadd.f32 %v349, 1.0
    %v395 = vlog2.pop %v394
    %v396 = vmul.f32 %v395, 0.6931472
    %v397 = vmul.f32 -0.5, %v349
    %v398 = vadd.f32 %v397, 1.0
    %v399 = vmul.f32 %v398, %v349
    %v400 = vand.u32 2147483647, %v349
    %vm401 = vcmp.lt.f32.partialorder %v400, 0.0004427343
    %v402 = vsel %vm401, %v399, %v396
    %v403 = vadd.f32 %v351, 1.0
    %v404 = vlog2.pop %v403
    %v405 = vmul.f32 %v404, 0.6931472
    %v406 = vmul.f32 -0.5, %v351
    %v407 = vadd.f32 %v406, 1.0
    %v408 = vmul.f32 %v407, %v351
    %v409 = vand.u32 2147483647, %v351
    %vm410 = vcmp.lt.f32.partialorder %v409, 0.0004427343
    %v411 = vsel %vm410, %v408, %v405
    %v412 = vadd.f32 %v353, 1.0
    %v413 = vlog2.pop %v412
    %v414 = vmul.f32 %v413, 0.6931472
    %v415 = vmul.f32 -0.5, %v353
    %v416 = vadd.f32 %v415, 1.0
    %v417 = vmul.f32 %v416, %v353
    %v418 = vand.u32 2147483647, %v353
    %vm419 = vcmp.lt.f32.partialorder %v418, 0.0004427343
    %v420 = vsel %vm419, %v417, %v414
    %v421 = vadd.f32 %v355, 1.0
    %v422 = vlog2.pop %v421
    %v423 = vmul.f32 %v422, 0.6931472
    %v424 = vmul.f32 -0.5, %v355
    %v425 = vadd.f32 %v424, 1.0
    %v426 = vmul.f32 %v425, %v355
    %v427 = vand.u32 2147483647, %v355
    %vm428 = vcmp.lt.f32.partialorder %v427, 0.0004427343
    %v429 = vsel %vm428, %v426, %v423
    %v430 = vadd.f32 %v357, 1.0
    %v431 = vlog2.pop %v430
    %v432 = vmul.f32 %v431, 0.6931472
    %v433 = vmul.f32 -0.5, %v357
    %v434 = vadd.f32 %v433, 1.0
    %v435 = vmul.f32 %v434, %v357
    %v436 = vand.u32 2147483647, %v357
    %vm437 = vcmp.lt.f32.partialorder %v436, 0.0004427343
    %v438 = vsel %vm437, %v435, %v432
    %v439 = vadd.f32 %v359, 1.0
    %v440 = vlog2.pop %v439
    %v441 = vmul.f32 %v440, 0.6931472
    %v442 = vmul.f32 -0.5, %v359
    %v443 = vadd.f32 %v442, 1.0
    %v444 = vmul.f32 %v443, %v359
    %v445 = vand.u32 2147483647, %v359
    %vm446 = vcmp.lt.f32.partialorder %v445, 0.0004427343
    %v447 = vsel %vm446, %v444, %v441
    %v448 = vadd.f32 %v361, 1.0
    %v449 = vlog2.pop %v448
    %v450 = vmul.f32 %v449, 0.6931472
    %v451 = vmul.f32 -0.5, %v361
    %v452 = vadd.f32 %v451, 1.0
    %v453 = vmul.f32 %v452, %v361
    %v454 = vand.u32 2147483647, %v361
    %vm455 = vcmp.lt.f32.partialorder %v454, 0.0004427343
    %v456 = vsel %vm455, %v453, %v450
    %v457 = vadd.f32 %v363, 1.0
    %v458 = vlog2.pop %v457
    %v459 = vmul.f32 %v458, 0.6931472
    %v460 = vmul.f32 -0.5, %v363
    %v461 = vadd.f32 %v460, 1.0
    %v462 = vmul.f32 %v461, %v363
    %v463 = vand.u32 2147483647, %v363
    %vm464 = vcmp.lt.f32.partialorder %v463, 0.0004427343
    %v465 = vsel %vm464, %v462, %v459
    %v466 = vadd.f32 %v365, 1.0
    %v467 = vlog2.pop %v466
    %v468 = vmul.f32 %v467, 0.6931472
    %v469 = vmul.f32 -0.5, %v365
    %v470 = vadd.f32 %v469, 1.0
    %v471 = vmul.f32 %v470, %v365
    %v472 = vand.u32 2147483647, %v365
    %vm473 = vcmp.lt.f32.partialorder %v472, 0.0004427343
    %v474 = vsel %vm473, %v471, %v468
    %v475 = vadd.f32 %v367, 1.0
    %v476 = vlog2.pop %v475
    %v477 = vmul.f32 %v476, 0.6931472
    %v478 = vmul.f32 -0.5, %v367
    %v479 = vadd.f32 %v478, 1.0
    %v480 = vmul.f32 %v479, %v367
    %v481 = vand.u32 2147483647, %v367
    %vm482 = vcmp.lt.f32.partialorder %v481, 0.0004427343
    %v483 = vsel %vm482, %v480, %v477
    %v484 = vadd.f32 %v369, 1.0
    %v485 = vlog2.pop %v484
    %v486 = vmul.f32 %v485, 0.6931472
    %v487 = vmul.f32 -0.5, %v369
    %v488 = vadd.f32 %v487, 1.0
    %v489 = vmul.f32 %v488, %v369
    %v490 = vand.u32 2147483647, %v369
    %vm491 = vcmp.lt.f32.partialorder %v490, 0.0004427343
    %v492 = vsel %vm491, %v489, %v486
    %v493 = vadd.f32 %v371, 1.0
    %v494 = vlog2.pop %v493
    %v495 = vmul.f32 %v494, 0.6931472
    %v496 = vmul.f32 -0.5, %v371
    %v497 = vadd.f32 %v496, 1.0
    %v498 = vmul.f32 %v497, %v371
    %v499 = vand.u32 2147483647, %v371
    %vm500 = vcmp.lt.f32.partialorder %v499, 0.0004427343
    %v501 = vsel %vm500, %v498, %v495
    %v502 = vadd.f32 %v373, 1.0
    %v503 = vlog2.pop %v502
    %v504 = vmul.f32 %v503, 0.6931472
    %v505 = vmul.f32 -0.5, %v373
    %v506 = vadd.f32 %v505, 1.0
    %v507 = vmul.f32 %v506, %v373
    %v508 = vand.u32 2147483647, %v373
    %vm509 = vcmp.lt.f32.partialorder %v508, 0.0004427343
    %v510 = vsel %vm509, %v507, %v504
    %v511 = vadd.f32 %v375, 1.0
    %v512 = vlog2.pop %v511
    %v513 = vmul.f32 %v512, 0.6931472
    %v514 = vmul.f32 -0.5, %v375
    %v515 = vadd.f32 %v514, 1.0
    %v516 = vmul.f32 %v515, %v375
    %v517 = vand.u32 2147483647, %v375
    %vm518 = vcmp.lt.f32.partialorder %v517, 0.0004427343
    %v519 = vsel %vm518, %v516, %v513
    %v520 = vadd.f32 %v264, %v384
    %v521 = vadd.f32 %v265, %v393
    %v522 = vadd.f32 %v266, %v402
    %v523 = vadd.f32 %v267, %v411
    %v524 = vadd.f32 %v268, %v420
    %v525 = vadd.f32 %v269, %v429
    %v526 = vadd.f32 %v270, %v438
    %v527 = vadd.f32 %v271, %v447
    %v528 = vadd.f32 %v272, %v456
    %v529 = vadd.f32 %v273, %v465
    %v530 = vadd.f32 %v274, %v474
    %v531 = vadd.f32 %v275, %v483
    %v532 = vadd.f32 %v276, %v492
    %v533 = vadd.f32 %v277, %v501
    %v534 = vadd.f32 %v278, %v510
    %v535 = vadd.f32 %v279, %v519
    %v536 = vsel %vm280, %v296, %v520
    %v537 = vsel %vm281, %v297, %v521
    %v538 = vsel %vm282, %v298, %v522
    %v539 = vsel %vm283, %v299, %v523
    %v540 = vsel %vm284, %v300, %v524
    %v541 = vsel %vm285, %v301, %v525
    %v542 = vsel %vm286, %v302, %v526
    %v543 = vsel %vm287, %v303, %v527
    %v544 = vsel %vm288, %v304, %v528
    %v545 = vsel %vm289, %v305, %v529
    %v546 = vsel %vm290, %v306, %v530
    %v547 = vsel %vm291, %v307, %v531
    %v548 = vsel %vm292, %v308, %v532
    %v549 = vsel %vm293, %v309, %v533
    %v550 = vsel %vm294, %v310, %v534
    %v551 = vsel %vm295, %v311, %v535
    %v552 = vmul.f32 %v248, %v536
    %v553 = vmul.f32 %v249, %v537
    %v554 = vmul.f32 %v250, %v538
    %v555 = vmul.f32 %v251, %v539
    %v556 = vmul.f32 %v252, %v540
    %v557 = vmul.f32 %v253, %v541
    %v558 = vmul.f32 %v254, %v542
    %v559 = vmul.f32 %v255, %v543
    %v560 = vmul.f32 %v256, %v544
    %v561 = vmul.f32 %v257, %v545
    %v562 = vmul.f32 %v258, %v546
    %v563 = vmul.f32 %v259, %v547
    %v564 = vmul.f32 %v260, %v548
    %v565 = vmul.f32 %v261, %v549
    %v566 = vmul.f32 %v262, %v550
    %v567 = vmul.f32 %v263, %v551
    %568 = vmatprep.subr.mxu0 0.0
    %569 = vmatpush1.msra.mxu0 %v46
    %570 = vmatprep.subr.mxu0 0.0
    %571 = vmatpush1.msra.mxu0 %v47
    %572 = vmatprep.subr.mxu0 0.0
    %573 = vmatpush1.msra.mxu0 %v48
    %574 = vmatprep.subr.mxu0 0.0
    %575 = vmatpush1.msra.mxu0 %v49
    %576 = vmatprep.subr.mxu0 0.0
    %577 = vmatpush1.msra.mxu0 0.0
    %578 = vmatprep.subr.mxu0 0.0
    %579 = vmatpush1.msra.mxu0 0.0
    %580 = vmatprep.subr.mxu0 0.0
    %581 = vmatpush1.msra.mxu0 0.0
    %582 = vmatprep.subr.mxu0 0.0
    %583 = vmatpush1.msra.mxu0 0.0
    %584 = vmatprep.subr.mxu0 0.0
    %585 = vmatpush1.msra.mxu0 0.0
    %586 = vmatprep.subr.mxu0 0.0
    %587 = vmatpush1.msra.mxu0 0.0
    %588 = vmatprep.subr.mxu0 0.0
    %589 = vmatpush1.msra.mxu0 0.0
    %590 = vmatprep.subr.mxu0 0.0
    %591 = vmatpush1.msra.mxu0 0.0
    %592 = vmatprep.subr.mxu0 0.0
    %593 = vmatpush1.msra.mxu0 0.0
    %594 = vmatprep.subr.mxu0 0.0
    %595 = vmatpush1.msra.mxu0 0.0
    %596 = vmatprep.subr.mxu0 0.0
    %597 = vmatpush1.msra.mxu0 0.0
    %598 = vmatprep.subr.mxu0 0.0
    %599 = vmatpush1.msra.mxu0 0.0
    %600 = vmatprep.subr.mxu0 0.0
    %601 = vmatpush1.msra.mxu0 0.0
    %602 = vmatprep.subr.mxu0 0.0
    %603 = vmatpush1.msra.mxu0 0.0
    %604 = vmatprep.subr.mxu0 0.0
    %605 = vmatpush1.msra.mxu0 0.0
    %606 = vmatprep.subr.mxu0 0.0
    %607 = vmatpush1.msra.mxu0 0.0
    %608 = vmatprep.subr.mxu0 0.0
    %609 = vmatpush1.msra.mxu0 0.0
    %610 = vmatprep.subr.mxu0 0.0
    %611 = vmatpush1.msra.mxu0 0.0
    %612 = vmatprep.subr.mxu0 0.0
    %613 = vmatpush1.msra.mxu0 0.0
    %614 = vmatprep.subr.mxu0 0.0
    %615 = vmatpush1.msra.mxu0 0.0
    %616 = vmatprep.subr.mxu0 0.0
    %617 = vmatpush1.msra.mxu0 0.0
    %618 = vmatprep.subr.mxu0 0.0
    %619 = vmatpush1.msra.mxu0 0.0
    %620 = vmatprep.subr.mxu0 0.0
    %621 = vmatpush1.msra.mxu0 0.0
    %622 = vmatprep.subr.mxu0 0.0
    %623 = vmatpush1.msra.mxu0 0.0
    %624 = vmatprep.subr.mxu0 0.0
    %625 = vmatpush1.msra.mxu0 0.0
    %626 = vmatprep.subr.mxu0 0.0
    %627 = vmatpush1.msra.mxu0 0.0
    %628 = vmatprep.subr.mxu0 0.0
    %629 = vmatpush1.msra.mxu0 0.0
    %630 = vmatprep.subr.mxu0 0.0
    %631 = vmatpush1.msra.mxu0 0.0
    %632 = vmatprep.mubr.f32.mxu0 0.0
    %633 = vmatmul.mubr.f32.gmra.mrb[0].mxu0 %v56
    %v634 = vpop.f32.mrb[0].mxu0
    %v635 = vadd.f32 %v552, %v634
    %v636 = vpop.f32.mrb[0].mxu0
    %637 = vmatprep.mubr.f32.mxu0 0.0
    %638 = vmatmul.mubr.f32.gmra.mrb[0].mxu0 %v59
    %v639 = vpop.f32.mrb[0].mxu0
    %v640 = vadd.f32 %v553, %v639
    %v641 = vpop.f32.mrb[0].mxu0
    %642 = vmatprep.mubr.f32.mxu0 0.0
    %643 = vmatmul.mubr.f32.gmra.mrb[0].mxu0 %v62
    %v644 = vpop.f32.mrb[0].mxu0
    %v645 = vadd.f32 %v554, %v644
    %v646 = vpop.f32.mrb[0].mxu0
    %647 = vmatprep.mubr.f32.mxu0 0.0
    %648 = vmatmul.mubr.f32.gmra.mrb[0].mxu0 %v65
    %v649 = vpop.f32.mrb[0].mxu0
    %v650 = vadd.f32 %v555, %v649
    %v651 = vpop.f32.mrb[0].mxu0
    %652 = vmatprep.mubr.f32.mxu0 0.0
    %653 = vmatmul.mubr.f32.gmra.mrb[0].mxu0 %v68
    %v654 = vpop.f32.mrb[0].mxu0
    %v655 = vadd.f32 %v556, %v654
    %v656 = vpop.f32.mrb[0].mxu0
    %657 = vmatprep.mubr.f32.mxu0 0.0
    %658 = vmatmul.mubr.f32.gmra.mrb[0].mxu0 %v71
    %v659 = vpop.f32.mrb[0].mxu0
    %v660 = vadd.f32 %v557, %v659
    %v661 = vpop.f32.mrb[0].mxu0
    %662 = vmatprep.mubr.f32.mxu0 0.0
    %663 = vmatmul.mubr.f32.gmra.mrb[0].mxu0 %v74
    %v664 = vpop.f32.mrb[0].mxu0
    %v665 = vadd.f32 %v558, %v664
    %v666 = vpop.f32.mrb[0].mxu0
    %667 = vmatprep.mubr.f32.mxu0 0.0
    %668 = vmatmul.mubr.f32.gmra.mrb[0].mxu0 %v77
    %v669 = vpop.f32.mrb[0].mxu0
    %v670 = vadd.f32 %v559, %v669
    %v671 = vpop.f32.mrb[0].mxu0
    %672 = vmatprep.mubr.f32.mxu0 0.0
    %673 = vmatmul.mubr.f32.gmra.mrb[0].mxu0 %v80
    %v674 = vpop.f32.mrb[0].mxu0
    %v675 = vadd.f32 %v560, %v674
    %v676 = vpop.f32.mrb[0].mxu0
    %677 = vmatprep.mubr.f32.mxu0 0.0
    %678 = vmatmul.mubr.f32.gmra.mrb[0].mxu0 %v83
    %v679 = vpop.f32.mrb[0].mxu0
    %v680 = vadd.f32 %v561, %v679
    %v681 = vpop.f32.mrb[0].mxu0
    %682 = vmatprep.mubr.f32.mxu0 0.0
    %683 = vmatmul.mubr.f32.gmra.mrb[0].mxu0 %v86
    %v684 = vpop.f32.mrb[0].mxu0
    %v685 = vadd.f32 %v562, %v684
    %v686 = vpop.f32.mrb[0].mxu0
    %687 = vmatprep.mubr.f32.mxu0 0.0
    %688 = vmatmul.mubr.f32.gmra.mrb[0].mxu0 %v89
    %v689 = vpop.f32.mrb[0].mxu0
    %v690 = vadd.f32 %v563, %v689
    %v691 = vpop.f32.mrb[0].mxu0
    %692 = vmatprep.mubr.f32.mxu0 0.0
    %693 = vmatmul.mubr.f32.gmra.mrb[0].mxu0 %v92
    %v694 = vpop.f32.mrb[0].mxu0
    %v695 = vadd.f32 %v564, %v694
    %v696 = vpop.f32.mrb[0].mxu0
    %697 = vmatprep.mubr.f32.mxu0 0.0
    %698 = vmatmul.mubr.f32.gmra.mrb[0].mxu0 %v95
    %v699 = vpop.f32.mrb[0].mxu0
    %v700 = vadd.f32 %v565, %v699
    %v701 = vpop.f32.mrb[0].mxu0
    %702 = vmatprep.mubr.f32.mxu0 0.0
    %703 = vmatmul.mubr.f32.gmra.mrb[0].mxu0 %v98
    %v704 = vpop.f32.mrb[0].mxu0
    %v705 = vadd.f32 %v566, %v704
    %v706 = vpop.f32.mrb[0].mxu0
    %707 = vmatprep.mubr.f32.mxu0 0.0
    %708 = vmatmul.mubr.f32.gmra.mrb[0].mxu0 %v101
    %v709 = vpop.f32.mrb[0].mxu0
    %v710 = vadd.f32 %v567, %v709
    %v711 = vpop.f32.mrb[0].mxu0
    %712 = vdwg.mxu0
    %v713 = vlaneseq
    %v714 = vand.u32 %v713, 127
    %vm715 = vcmp.lt.s32.totalorder %v714, 4
    %v716 = vsel %vm715, %v635, -inf
    %v717 = vsel %vm715, %v640, -inf
    %v718 = vsel %vm715, %v645, -inf
    %v719 = vsel %vm715, %v650, -inf
    %v720 = vsel %vm715, %v655, -inf
    %v721 = vsel %vm715, %v660, -inf
    %v722 = vsel %vm715, %v665, -inf
    %v723 = vsel %vm715, %v670, -inf
    %v724 = vsel %vm715, %v675, -inf
    %v725 = vsel %vm715, %v680, -inf
    %v726 = vsel %vm715, %v685, -inf
    %v727 = vsel %vm715, %v690, -inf
    %v728 = vsel %vm715, %v695, -inf
    %v729 = vsel %vm715, %v700, -inf
    %v730 = vsel %vm715, %v705, -inf
    %v731 = vsel %vm715, %v710, -inf
    %732 = vmax.xlane.f32.xlu0 %v716
    %v733 = vpop.xlane.xlu0 %732
    %734 = vmax.xlane.f32.xlu0 %v717
    %v735 = vpop.xlane.xlu0 %734
    %736 = vmax.xlane.f32.xlu0 %v718
    %v737 = vpop.xlane.xlu0 %736
    %738 = vmax.xlane.f32.xlu0 %v719
    %v739 = vpop.xlane.xlu0 %738
    %740 = vmax.xlane.f32.xlu0 %v720
    %v741 = vpop.xlane.xlu0 %740
    %742 = vmax.xlane.f32.xlu0 %v721
    %v743 = vpop.xlane.xlu0 %742
    %744 = vmax.xlane.f32.xlu0 %v722
    %v745 = vpop.xlane.xlu0 %744
    %746 = vmax.xlane.f32.xlu0 %v723
    %v747 = vpop.xlane.xlu0 %746
    %748 = vmax.xlane.f32.xlu0 %v724
    %v749 = vpop.xlane.xlu0 %748
    %750 = vmax.xlane.f32.xlu0 %v725
    %v751 = vpop.xlane.xlu0 %750
    %752 = vmax.xlane.f32.xlu0 %v726
    %v753 = vpop.xlane.xlu0 %752
    %754 = vmax.xlane.f32.xlu0 %v727
    %v755 = vpop.xlane.xlu0 %754
    %756 = vmax.xlane.f32.xlu0 %v728
    %v757 = vpop.xlane.xlu0 %756
    %758 = vmax.xlane.f32.xlu0 %v729
    %v759 = vpop.xlane.xlu0 %758
    %760 = vmax.xlane.f32.xlu0 %v730
    %v761 = vpop.xlane.xlu0 %760
    %762 = vmax.xlane.f32.xlu0 %v731
    %v763 = vpop.xlane.xlu0 %762
    %vm764 = vcmp.eq.f32.partialorder %v716, %v733
    %vm765 = vcmp.eq.f32.partialorder %v717, %v735
    %vm766 = vcmp.eq.f32.partialorder %v718, %v737
    %vm767 = vcmp.eq.f32.partialorder %v719, %v739
    %vm768 = vcmp.eq.f32.partialorder %v720, %v741
    %vm769 = vcmp.eq.f32.partialorder %v721, %v743
    %vm770 = vcmp.eq.f32.partialorder %v722, %v745
    %vm771 = vcmp.eq.f32.partialorder %v723, %v747
    %vm772 = vcmp.eq.f32.partialorder %v724, %v749
    %vm773 = vcmp.eq.f32.partialorder %v725, %v751
    %vm774 = vcmp.eq.f32.partialorder %v726, %v753
    %vm775 = vcmp.eq.f32.partialorder %v727, %v755
    %vm776 = vcmp.eq.f32.partialorder %v728, %v757
    %vm777 = vcmp.eq.f32.partialorder %v729, %v759
    %vm778 = vcmp.eq.f32.partialorder %v730, %v761
    %vm779 = vcmp.eq.f32.partialorder %v731, %v763
    %v780 = vsel %vm764, %v714, 128
    %v781 = vsel %vm765, %v714, 128
    %v782 = vsel %vm766, %v714, 128
    %v783 = vsel %vm767, %v714, 128
    %v784 = vsel %vm768, %v714, 128
    %v785 = vsel %vm769, %v714, 128
    %v786 = vsel %vm770, %v714, 128
    %v787 = vsel %vm771, %v714, 128
    %v788 = vsel %vm772, %v714, 128
    %v789 = vsel %vm773, %v714, 128
    %v790 = vsel %vm774, %v714, 128
    %v791 = vsel %vm775, %v714, 128
    %v792 = vsel %vm776, %v714, 128
    %v793 = vsel %vm777, %v714, 128
    %v794 = vsel %vm778, %v714, 128
    %v795 = vsel %vm779, %v714, 128
    %v796 = vand.u32 %v780, 65535
    %v797 = vshra.s32 %v780, 16
    %v798 = vcvt.s32.f32 %v796
    %v799 = vcvt.s32.f32 %v797
    %800 = vmin.xlane.f32.xlu0 %v799
    %v801 = vpop.xlane.xlu0 %800
    %vm802 = vcmp.eq.f32.partialorder %v799, %v801
    %v803 = vsel %vm802, %v798, inf
    %804 = vmin.xlane.f32.xlu0 %v803
    %v805 = vpop.xlane.xlu0 %804
    %v806 = vcvt.f32.s32 %v805
    %v807 = vcvt.f32.s32 %v801
    %v808 = vshll.u32 %v807, 16
    %v809 = vadd.s32 %v808, %v806
    %v810 = vand.u32 %v781, 65535
    %v811 = vshra.s32 %v781, 16
    %v812 = vcvt.s32.f32 %v810
    %v813 = vcvt.s32.f32 %v811
    %814 = vmin.xlane.f32.xlu0 %v813
    %v815 = vpop.xlane.xlu0 %814
    %vm816 = vcmp.eq.f32.partialorder %v813, %v815
    %v817 = vsel %vm816, %v812, inf
    %818 = vmin.xlane.f32.xlu0 %v817
    %v819 = vpop.xlane.xlu0 %818
    %v820 = vcvt.f32.s32 %v819
    %v821 = vcvt.f32.s32 %v815
    %v822 = vshll.u32 %v821, 16
    %v823 = vadd.s32 %v822, %v820
    %v824 = vand.u32 %v782, 65535
    %v825 = vshra.s32 %v782, 16
    %v826 = vcvt.s32.f32 %v824
    %v827 = vcvt.s32.f32 %v825
    %828 = vmin.xlane.f32.xlu0 %v827
    %v829 = vpop.xlane.xlu0 %828
    %vm830 = vcmp.eq.f32.partialorder %v827, %v829
    %v831 = vsel %vm830, %v826, inf
    %832 = vmin.xlane.f32.xlu0 %v831
    %v833 = vpop.xlane.xlu0 %832
    %v834 = vcvt.f32.s32 %v833
    %v835 = vcvt.f32.s32 %v829
    %v836 = vshll.u32 %v835, 16
    %v837 = vadd.s32 %v836, %v834
    %v838 = vand.u32 %v783, 65535
    %v839 = vshra.s32 %v783, 16
    %v840 = vcvt.s32.f32 %v838
    %v841 = vcvt.s32.f32 %v839
    %842 = vmin.xlane.f32.xlu0 %v841
    %v843 = vpop.xlane.xlu0 %842
    %vm844 = vcmp.eq.f32.partialorder %v841, %v843
    %v845 = vsel %vm844, %v840, inf
    %846 = vmin.xlane.f32.xlu0 %v845
    %v847 = vpop.xlane.xlu0 %846
    %v848 = vcvt.f32.s32 %v847
    %v849 = vcvt.f32.s32 %v843
    %v850 = vshll.u32 %v849, 16
    %v851 = vadd.s32 %v850, %v848
    %v852 = vand.u32 %v784, 65535
    %v853 = vshra.s32 %v784, 16
    %v854 = vcvt.s32.f32 %v852
    %v855 = vcvt.s32.f32 %v853
    %856 = vmin.xlane.f32.xlu0 %v855
    %v857 = vpop.xlane.xlu0 %856
    %vm858 = vcmp.eq.f32.partialorder %v855, %v857
    %v859 = vsel %vm858, %v854, inf
    %860 = vmin.xlane.f32.xlu0 %v859
    %v861 = vpop.xlane.xlu0 %860
    %v862 = vcvt.f32.s32 %v861
    %v863 = vcvt.f32.s32 %v857
    %v864 = vshll.u32 %v863, 16
    %v865 = vadd.s32 %v864, %v862
    %v866 = vand.u32 %v785, 65535
    %v867 = vshra.s32 %v785, 16
    %v868 = vcvt.s32.f32 %v866
    %v869 = vcvt.s32.f32 %v867
    %870 = vmin.xlane.f32.xlu0 %v869
    %v871 = vpop.xlane.xlu0 %870
    %vm872 = vcmp.eq.f32.partialorder %v869, %v871
    %v873 = vsel %vm872, %v868, inf
    %874 = vmin.xlane.f32.xlu0 %v873
    %v875 = vpop.xlane.xlu0 %874
    %v876 = vcvt.f32.s32 %v875
    %v877 = vcvt.f32.s32 %v871
    %v878 = vshll.u32 %v877, 16
    %v879 = vadd.s32 %v878, %v876
    %v880 = vand.u32 %v786, 65535
    %v881 = vshra.s32 %v786, 16
    %v882 = vcvt.s32.f32 %v880
    %v883 = vcvt.s32.f32 %v881
    %884 = vmin.xlane.f32.xlu0 %v883
    %v885 = vpop.xlane.xlu0 %884
    %vm886 = vcmp.eq.f32.partialorder %v883, %v885
    %v887 = vsel %vm886, %v882, inf
    %888 = vmin.xlane.f32.xlu0 %v887
    %v889 = vpop.xlane.xlu0 %888
    %v890 = vcvt.f32.s32 %v889
    %v891 = vcvt.f32.s32 %v885
    %v892 = vshll.u32 %v891, 16
    %v893 = vadd.s32 %v892, %v890
    %v894 = vand.u32 %v787, 65535
    %v895 = vshra.s32 %v787, 16
    %v896 = vcvt.s32.f32 %v894
    %v897 = vcvt.s32.f32 %v895
    %898 = vmin.xlane.f32.xlu0 %v897
    %v899 = vpop.xlane.xlu0 %898
    %vm900 = vcmp.eq.f32.partialorder %v897, %v899
    %v901 = vsel %vm900, %v896, inf
    %902 = vmin.xlane.f32.xlu0 %v901
    %v903 = vpop.xlane.xlu0 %902
    %v904 = vcvt.f32.s32 %v903
    %v905 = vcvt.f32.s32 %v899
    %v906 = vshll.u32 %v905, 16
    %v907 = vadd.s32 %v906, %v904
    %v908 = vand.u32 %v788, 65535
    %v909 = vshra.s32 %v788, 16
    %v910 = vcvt.s32.f32 %v908
    %v911 = vcvt.s32.f32 %v909
    %912 = vmin.xlane.f32.xlu0 %v911
    %v913 = vpop.xlane.xlu0 %912
    %vm914 = vcmp.eq.f32.partialorder %v911, %v913
    %v915 = vsel %vm914, %v910, inf
    %916 = vmin.xlane.f32.xlu0 %v915
    %v917 = vpop.xlane.xlu0 %916
    %v918 = vcvt.f32.s32 %v917
    %v919 = vcvt.f32.s32 %v913
    %v920 = vshll.u32 %v919, 16
    %v921 = vadd.s32 %v920, %v918
    %v922 = vand.u32 %v789, 65535
    %v923 = vshra.s32 %v789, 16
    %v924 = vcvt.s32.f32 %v922
    %v925 = vcvt.s32.f32 %v923
    %926 = vmin.xlane.f32.xlu0 %v925
    %v927 = vpop.xlane.xlu0 %926
    %vm928 = vcmp.eq.f32.partialorder %v925, %v927
    %v929 = vsel %vm928, %v924, inf
    %930 = vmin.xlane.f32.xlu0 %v929
    %v931 = vpop.xlane.xlu0 %930
    %v932 = vcvt.f32.s32 %v931
    %v933 = vcvt.f32.s32 %v927
    %v934 = vshll.u32 %v933, 16
    %v935 = vadd.s32 %v934, %v932
    %v936 = vand.u32 %v790, 65535
    %v937 = vshra.s32 %v790, 16
    %v938 = vcvt.s32.f32 %v936
    %v939 = vcvt.s32.f32 %v937
    %940 = vmin.xlane.f32.xlu0 %v939
    %v941 = vpop.xlane.xlu0 %940
    %vm942 = vcmp.eq.f32.partialorder %v939, %v941
    %v943 = vsel %vm942, %v938, inf
    %944 = vmin.xlane.f32.xlu0 %v943
    %v945 = vpop.xlane.xlu0 %944
    %v946 = vcvt.f32.s32 %v945
    %v947 = vcvt.f32.s32 %v941
    %v948 = vshll.u32 %v947, 16
    %v949 = vadd.s32 %v948, %v946
    %v950 = vand.u32 %v791, 65535
    %v951 = vshra.s32 %v791, 16
    %v952 = vcvt.s32.f32 %v950
    %v953 = vcvt.s32.f32 %v951
    %954 = vmin.xlane.f32.xlu0 %v953
    %v955 = vpop.xlane.xlu0 %954
    %vm956 = vcmp.eq.f32.partialorder %v953, %v955
    %v957 = vsel %vm956, %v952, inf
    %958 = vmin.xlane.f32.xlu0 %v957
    %v959 = vpop.xlane.xlu0 %958
    %v960 = vcvt.f32.s32 %v959
    %v961 = vcvt.f32.s32 %v955
    %v962 = vshll.u32 %v961, 16
    %v963 = vadd.s32 %v962, %v960
    %v964 = vand.u32 %v792, 65535
    %v965 = vshra.s32 %v792, 16
    %v966 = vcvt.s32.f32 %v964
    %v967 = vcvt.s32.f32 %v965
    %968 = vmin.xlane.f32.xlu0 %v967
    %v969 = vpop.xlane.xlu0 %968
    %vm970 = vcmp.eq.f32.partialorder %v967, %v969
    %v971 = vsel %vm970, %v966, inf
    %972 = vmin.xlane.f32.xlu0 %v971
    %v973 = vpop.xlane.xlu0 %972
    %v974 = vcvt.f32.s32 %v973
    %v975 = vcvt.f32.s32 %v969
    %v976 = vshll.u32 %v975, 16
    %v977 = vadd.s32 %v976, %v974
    %v978 = vand.u32 %v793, 65535
    %v979 = vshra.s32 %v793, 16
    %v980 = vcvt.s32.f32 %v978
    %v981 = vcvt.s32.f32 %v979
    %982 = vmin.xlane.f32.xlu0 %v981
    %v983 = vpop.xlane.xlu0 %982
    %vm984 = vcmp.eq.f32.partialorder %v981, %v983
    %v985 = vsel %vm984, %v980, inf
    %986 = vmin.xlane.f32.xlu0 %v985
    %v987 = vpop.xlane.xlu0 %986
    %v988 = vcvt.f32.s32 %v987
    %v989 = vcvt.f32.s32 %v983
    %v990 = vshll.u32 %v989, 16
    %v991 = vadd.s32 %v990, %v988
    %v992 = vand.u32 %v794, 65535
    %v993 = vshra.s32 %v794, 16
    %v994 = vcvt.s32.f32 %v992
    %v995 = vcvt.s32.f32 %v993
    %996 = vmin.xlane.f32.xlu0 %v995
    %v997 = vpop.xlane.xlu0 %996
    %vm998 = vcmp.eq.f32.partialorder %v995, %v997
    %v999 = vsel %vm998, %v994, inf
    %1000 = vmin.xlane.f32.xlu0 %v999
    %v1001 = vpop.xlane.xlu0 %1000
    %v1002 = vcvt.f32.s32 %v1001
    %v1003 = vcvt.f32.s32 %v997
    %v1004 = vshll.u32 %v1003, 16
    %v1005 = vadd.s32 %v1004, %v1002
    %v1006 = vand.u32 %v795, 65535
    %v1007 = vshra.s32 %v795, 16
    %v1008 = vcvt.s32.f32 %v1006
    %v1009 = vcvt.s32.f32 %v1007
    %1010 = vmin.xlane.f32.xlu0 %v1009
    %v1011 = vpop.xlane.xlu0 %1010
    %vm1012 = vcmp.eq.f32.partialorder %v1009, %v1011
    %v1013 = vsel %vm1012, %v1008, inf
    %1014 = vmin.xlane.f32.xlu0 %v1013
    %v1015 = vpop.xlane.xlu0 %1014
    %v1016 = vcvt.f32.s32 %v1015
    %v1017 = vcvt.f32.s32 %v1011
    %v1018 = vshll.u32 %v1017, 16
    %v1019 = vadd.s32 %v1018, %v1016
    %vm1020 = vcmp.eq.s32.totalorder %v714, %v809
    %vm1021 = vcmp.eq.s32.totalorder %v714, %v823
    %vm1022 = vcmp.eq.s32.totalorder %v714, %v837
    %vm1023 = vcmp.eq.s32.totalorder %v714, %v851
    %vm1024 = vcmp.eq.s32.totalorder %v714, %v865
    %vm1025 = vcmp.eq.s32.totalorder %v714, %v879
    %vm1026 = vcmp.eq.s32.totalorder %v714, %v893
    %vm1027 = vcmp.eq.s32.totalorder %v714, %v907
    %vm1028 = vcmp.eq.s32.totalorder %v714, %v921
    %vm1029 = vcmp.eq.s32.totalorder %v714, %v935
    %vm1030 = vcmp.eq.s32.totalorder %v714, %v949
    %vm1031 = vcmp.eq.s32.totalorder %v714, %v963
    %vm1032 = vcmp.eq.s32.totalorder %v714, %v977
    %vm1033 = vcmp.eq.s32.totalorder %v714, %v991
    %vm1034 = vcmp.eq.s32.totalorder %v714, %v1005
    %vm1035 = vcmp.eq.s32.totalorder %v714, %v1019
    %v1036 = vsel %vm1020, -inf, %v716
    %v1037 = vsel %vm1021, -inf, %v717
    %v1038 = vsel %vm1022, -inf, %v718
    %v1039 = vsel %vm1023, -inf, %v719
    %v1040 = vsel %vm1024, -inf, %v720
    %v1041 = vsel %vm1025, -inf, %v721
    %v1042 = vsel %vm1026, -inf, %v722
    %v1043 = vsel %vm1027, -inf, %v723
    %v1044 = vsel %vm1028, -inf, %v724
    %v1045 = vsel %vm1029, -inf, %v725
    %v1046 = vsel %vm1030, -inf, %v726
    %v1047 = vsel %vm1031, -inf, %v727
    %v1048 = vsel %vm1032, -inf, %v728
    %v1049 = vsel %vm1033, -inf, %v729
    %v1050 = vsel %vm1034, -inf, %v730
    %v1051 = vsel %vm1035, -inf, %v731
    %1052 = vmax.xlane.f32.xlu0 %v1036
    %v1053 = vpop.xlane.xlu0 %1052
    %1054 = vmax.xlane.f32.xlu0 %v1037
    %v1055 = vpop.xlane.xlu0 %1054
    %1056 = vmax.xlane.f32.xlu0 %v1038
    %v1057 = vpop.xlane.xlu0 %1056
    %1058 = vmax.xlane.f32.xlu0 %v1039
    %v1059 = vpop.xlane.xlu0 %1058
    %1060 = vmax.xlane.f32.xlu0 %v1040
    %v1061 = vpop.xlane.xlu0 %1060
    %1062 = vmax.xlane.f32.xlu0 %v1041
    %v1063 = vpop.xlane.xlu0 %1062
    %1064 = vmax.xlane.f32.xlu0 %v1042
    %v1065 = vpop.xlane.xlu0 %1064
    %1066 = vmax.xlane.f32.xlu0 %v1043
    %v1067 = vpop.xlane.xlu0 %1066
    %1068 = vmax.xlane.f32.xlu0 %v1044
    %v1069 = vpop.xlane.xlu0 %1068
    %1070 = vmax.xlane.f32.xlu0 %v1045
    %v1071 = vpop.xlane.xlu0 %1070
    %1072 = vmax.xlane.f32.xlu0 %v1046
    %v1073 = vpop.xlane.xlu0 %1072
    %1074 = vmax.xlane.f32.xlu0 %v1047
    %v1075 = vpop.xlane.xlu0 %1074
    %1076 = vmax.xlane.f32.xlu0 %v1048
    %v1077 = vpop.xlane.xlu0 %1076
    %1078 = vmax.xlane.f32.xlu0 %v1049
    %v1079 = vpop.xlane.xlu0 %1078
    %1080 = vmax.xlane.f32.xlu0 %v1050
    %v1081 = vpop.xlane.xlu0 %1080
    %1082 = vmax.xlane.f32.xlu0 %v1051
    %v1083 = vpop.xlane.xlu0 %1082
    %vm1084 = vcmp.eq.f32.partialorder %v1036, %v1053
    %vm1085 = vcmp.eq.f32.partialorder %v1037, %v1055
    %vm1086 = vcmp.eq.f32.partialorder %v1038, %v1057
    %vm1087 = vcmp.eq.f32.partialorder %v1039, %v1059
    %vm1088 = vcmp.eq.f32.partialorder %v1040, %v1061
    %vm1089 = vcmp.eq.f32.partialorder %v1041, %v1063
    %vm1090 = vcmp.eq.f32.partialorder %v1042, %v1065
    %vm1091 = vcmp.eq.f32.partialorder %v1043, %v1067
    %vm1092 = vcmp.eq.f32.partialorder %v1044, %v1069
    %vm1093 = vcmp.eq.f32.partialorder %v1045, %v1071
    %vm1094 = vcmp.eq.f32.partialorder %v1046, %v1073
    %vm1095 = vcmp.eq.f32.partialorder %v1047, %v1075
    %vm1096 = vcmp.eq.f32.partialorder %v1048, %v1077
    %vm1097 = vcmp.eq.f32.partialorder %v1049, %v1079
    %vm1098 = vcmp.eq.f32.partialorder %v1050, %v1081
    %vm1099 = vcmp.eq.f32.partialorder %v1051, %v1083
    %v1100 = vsel %vm1084, %v714, 128
    %v1101 = vsel %vm1085, %v714, 128
    %v1102 = vsel %vm1086, %v714, 128
    %v1103 = vsel %vm1087, %v714, 128
    %v1104 = vsel %vm1088, %v714, 128
    %v1105 = vsel %vm1089, %v714, 128
    %v1106 = vsel %vm1090, %v714, 128
    %v1107 = vsel %vm1091, %v714, 128
    %v1108 = vsel %vm1092, %v714, 128
    %v1109 = vsel %vm1093, %v714, 128
    %v1110 = vsel %vm1094, %v714, 128
    %v1111 = vsel %vm1095, %v714, 128
    %v1112 = vsel %vm1096, %v714, 128
    %v1113 = vsel %vm1097, %v714, 128
    %v1114 = vsel %vm1098, %v714, 128
    %v1115 = vsel %vm1099, %v714, 128
    %v1116 = vand.u32 %v1100, 65535
    %v1117 = vshra.s32 %v1100, 16
    %v1118 = vcvt.s32.f32 %v1116
    %v1119 = vcvt.s32.f32 %v1117
    %1120 = vmin.xlane.f32.xlu0 %v1119
    %v1121 = vpop.xlane.xlu0 %1120
    %vm1122 = vcmp.eq.f32.partialorder %v1119, %v1121
    %v1123 = vsel %vm1122, %v1118, inf
    %1124 = vmin.xlane.f32.xlu0 %v1123
    %v1125 = vpop.xlane.xlu0 %1124
    %v1126 = vcvt.f32.s32 %v1125
    %v1127 = vcvt.f32.s32 %v1121
    %v1128 = vshll.u32 %v1127, 16
    %v1129 = vadd.s32 %v1128, %v1126
    %v1130 = vand.u32 %v1101, 65535
    %v1131 = vshra.s32 %v1101, 16
    %v1132 = vcvt.s32.f32 %v1130
    %v1133 = vcvt.s32.f32 %v1131
    %1134 = vmin.xlane.f32.xlu0 %v1133
    %v1135 = vpop.xlane.xlu0 %1134
    %vm1136 = vcmp.eq.f32.partialorder %v1133, %v1135
    %v1137 = vsel %vm1136, %v1132, inf
    %1138 = vmin.xlane.f32.xlu0 %v1137
    %v1139 = vpop.xlane.xlu0 %1138
    %v1140 = vcvt.f32.s32 %v1139
    %v1141 = vcvt.f32.s32 %v1135
    %v1142 = vshll.u32 %v1141, 16
    %v1143 = vadd.s32 %v1142, %v1140
    %v1144 = vand.u32 %v1102, 65535
    %v1145 = vshra.s32 %v1102, 16
    %v1146 = vcvt.s32.f32 %v1144
    %v1147 = vcvt.s32.f32 %v1145
    %1148 = vmin.xlane.f32.xlu0 %v1147
    %v1149 = vpop.xlane.xlu0 %1148
    %vm1150 = vcmp.eq.f32.partialorder %v1147, %v1149
    %v1151 = vsel %vm1150, %v1146, inf
    %1152 = vmin.xlane.f32.xlu0 %v1151
    %v1153 = vpop.xlane.xlu0 %1152
    %v1154 = vcvt.f32.s32 %v1153
    %v1155 = vcvt.f32.s32 %v1149
    %v1156 = vshll.u32 %v1155, 16
    %v1157 = vadd.s32 %v1156, %v1154
    %v1158 = vand.u32 %v1103, 65535
    %v1159 = vshra.s32 %v1103, 16
    %v1160 = vcvt.s32.f32 %v1158
    %v1161 = vcvt.s32.f32 %v1159
    %1162 = vmin.xlane.f32.xlu0 %v1161
    %v1163 = vpop.xlane.xlu0 %1162
    %vm1164 = vcmp.eq.f32.partialorder %v1161, %v1163
    %v1165 = vsel %vm1164, %v1160, inf
    %1166 = vmin.xlane.f32.xlu0 %v1165
    %v1167 = vpop.xlane.xlu0 %1166
    %v1168 = vcvt.f32.s32 %v1167
    %v1169 = vcvt.f32.s32 %v1163
    %v1170 = vshll.u32 %v1169, 16
    %v1171 = vadd.s32 %v1170, %v1168
    %v1172 = vand.u32 %v1104, 65535
    %v1173 = vshra.s32 %v1104, 16
    %v1174 = vcvt.s32.f32 %v1172
    %v1175 = vcvt.s32.f32 %v1173
    %1176 = vmin.xlane.f32.xlu0 %v1175
    %v1177 = vpop.xlane.xlu0 %1176
    %vm1178 = vcmp.eq.f32.partialorder %v1175, %v1177
    %v1179 = vsel %vm1178, %v1174, inf
    %1180 = vmin.xlane.f32.xlu0 %v1179
    %v1181 = vpop.xlane.xlu0 %1180
    %v1182 = vcvt.f32.s32 %v1181
    %v1183 = vcvt.f32.s32 %v1177
    %v1184 = vshll.u32 %v1183, 16
    %v1185 = vadd.s32 %v1184, %v1182
    %v1186 = vand.u32 %v1105, 65535
    %v1187 = vshra.s32 %v1105, 16
    %v1188 = vcvt.s32.f32 %v1186
    %v1189 = vcvt.s32.f32 %v1187
    %1190 = vmin.xlane.f32.xlu0 %v1189
    %v1191 = vpop.xlane.xlu0 %1190
    %vm1192 = vcmp.eq.f32.partialorder %v1189, %v1191
    %v1193 = vsel %vm1192, %v1188, inf
    %1194 = vmin.xlane.f32.xlu0 %v1193
    %v1195 = vpop.xlane.xlu0 %1194
    %v1196 = vcvt.f32.s32 %v1195
    %v1197 = vcvt.f32.s32 %v1191
    %v1198 = vshll.u32 %v1197, 16
    %v1199 = vadd.s32 %v1198, %v1196
    %v1200 = vand.u32 %v1106, 65535
    %v1201 = vshra.s32 %v1106, 16
    %v1202 = vcvt.s32.f32 %v1200
    %v1203 = vcvt.s32.f32 %v1201
    %1204 = vmin.xlane.f32.xlu0 %v1203
    %v1205 = vpop.xlane.xlu0 %1204
    %vm1206 = vcmp.eq.f32.partialorder %v1203, %v1205
    %v1207 = vsel %vm1206, %v1202, inf
    %1208 = vmin.xlane.f32.xlu0 %v1207
    %v1209 = vpop.xlane.xlu0 %1208
    %v1210 = vcvt.f32.s32 %v1209
    %v1211 = vcvt.f32.s32 %v1205
    %v1212 = vshll.u32 %v1211, 16
    %v1213 = vadd.s32 %v1212, %v1210
    %v1214 = vand.u32 %v1107, 65535
    %v1215 = vshra.s32 %v1107, 16
    %v1216 = vcvt.s32.f32 %v1214
    %v1217 = vcvt.s32.f32 %v1215
    %1218 = vmin.xlane.f32.xlu0 %v1217
    %v1219 = vpop.xlane.xlu0 %1218
    %vm1220 = vcmp.eq.f32.partialorder %v1217, %v1219
    %v1221 = vsel %vm1220, %v1216, inf
    %1222 = vmin.xlane.f32.xlu0 %v1221
    %v1223 = vpop.xlane.xlu0 %1222
    %v1224 = vcvt.f32.s32 %v1223
    %v1225 = vcvt.f32.s32 %v1219
    %v1226 = vshll.u32 %v1225, 16
    %v1227 = vadd.s32 %v1226, %v1224
    %v1228 = vand.u32 %v1108, 65535
    %v1229 = vshra.s32 %v1108, 16
    %v1230 = vcvt.s32.f32 %v1228
    %v1231 = vcvt.s32.f32 %v1229
    %1232 = vmin.xlane.f32.xlu0 %v1231
    %v1233 = vpop.xlane.xlu0 %1232
    %vm1234 = vcmp.eq.f32.partialorder %v1231, %v1233
    %v1235 = vsel %vm1234, %v1230, inf
    %1236 = vmin.xlane.f32.xlu0 %v1235
    %v1237 = vpop.xlane.xlu0 %1236
    %v1238 = vcvt.f32.s32 %v1237
    %v1239 = vcvt.f32.s32 %v1233
    %v1240 = vshll.u32 %v1239, 16
    %v1241 = vadd.s32 %v1240, %v1238
    %v1242 = vand.u32 %v1109, 65535
    %v1243 = vshra.s32 %v1109, 16
    %v1244 = vcvt.s32.f32 %v1242
    %v1245 = vcvt.s32.f32 %v1243
    %1246 = vmin.xlane.f32.xlu0 %v1245
    %v1247 = vpop.xlane.xlu0 %1246
    %vm1248 = vcmp.eq.f32.partialorder %v1245, %v1247
    %v1249 = vsel %vm1248, %v1244, inf
    %1250 = vmin.xlane.f32.xlu0 %v1249
    %v1251 = vpop.xlane.xlu0 %1250
    %v1252 = vcvt.f32.s32 %v1251
    %v1253 = vcvt.f32.s32 %v1247
    %v1254 = vshll.u32 %v1253, 16
    %v1255 = vadd.s32 %v1254, %v1252
    %v1256 = vand.u32 %v1110, 65535
    %v1257 = vshra.s32 %v1110, 16
    %v1258 = vcvt.s32.f32 %v1256
    %v1259 = vcvt.s32.f32 %v1257
    %1260 = vmin.xlane.f32.xlu0 %v1259
    %v1261 = vpop.xlane.xlu0 %1260
    %vm1262 = vcmp.eq.f32.partialorder %v1259, %v1261
    %v1263 = vsel %vm1262, %v1258, inf
    %1264 = vmin.xlane.f32.xlu0 %v1263
    %v1265 = vpop.xlane.xlu0 %1264
    %v1266 = vcvt.f32.s32 %v1265
    %v1267 = vcvt.f32.s32 %v1261
    %v1268 = vshll.u32 %v1267, 16
    %v1269 = vadd.s32 %v1268, %v1266
    %v1270 = vand.u32 %v1111, 65535
    %v1271 = vshra.s32 %v1111, 16
    %v1272 = vcvt.s32.f32 %v1270
    %v1273 = vcvt.s32.f32 %v1271
    %1274 = vmin.xlane.f32.xlu0 %v1273
    %v1275 = vpop.xlane.xlu0 %1274
    %vm1276 = vcmp.eq.f32.partialorder %v1273, %v1275
    %v1277 = vsel %vm1276, %v1272, inf
    %1278 = vmin.xlane.f32.xlu0 %v1277
    %v1279 = vpop.xlane.xlu0 %1278
    %v1280 = vcvt.f32.s32 %v1279
    %v1281 = vcvt.f32.s32 %v1275
    %v1282 = vshll.u32 %v1281, 16
    %v1283 = vadd.s32 %v1282, %v1280
    %v1284 = vand.u32 %v1112, 65535
    %v1285 = vshra.s32 %v1112, 16
    %v1286 = vcvt.s32.f32 %v1284
    %v1287 = vcvt.s32.f32 %v1285
    %1288 = vmin.xlane.f32.xlu0 %v1287
    %v1289 = vpop.xlane.xlu0 %1288
    %vm1290 = vcmp.eq.f32.partialorder %v1287, %v1289
    %v1291 = vsel %vm1290, %v1286, inf
    %1292 = vmin.xlane.f32.xlu0 %v1291
    %v1293 = vpop.xlane.xlu0 %1292
    %v1294 = vcvt.f32.s32 %v1293
    %v1295 = vcvt.f32.s32 %v1289
    %v1296 = vshll.u32 %v1295, 16
    %v1297 = vadd.s32 %v1296, %v1294
    %v1298 = vand.u32 %v1113, 65535
    %v1299 = vshra.s32 %v1113, 16
    %v1300 = vcvt.s32.f32 %v1298
    %v1301 = vcvt.s32.f32 %v1299
    %1302 = vmin.xlane.f32.xlu0 %v1301
    %v1303 = vpop.xlane.xlu0 %1302
    %vm1304 = vcmp.eq.f32.partialorder %v1301, %v1303
    %v1305 = vsel %vm1304, %v1300, inf
    %1306 = vmin.xlane.f32.xlu0 %v1305
    %v1307 = vpop.xlane.xlu0 %1306
    %v1308 = vcvt.f32.s32 %v1307
    %v1309 = vcvt.f32.s32 %v1303
    %v1310 = vshll.u32 %v1309, 16
    %v1311 = vadd.s32 %v1310, %v1308
    %v1312 = vand.u32 %v1114, 65535
    %v1313 = vshra.s32 %v1114, 16
    %v1314 = vcvt.s32.f32 %v1312
    %v1315 = vcvt.s32.f32 %v1313
    %1316 = vmin.xlane.f32.xlu0 %v1315
    %v1317 = vpop.xlane.xlu0 %1316
    %vm1318 = vcmp.eq.f32.partialorder %v1315, %v1317
    %v1319 = vsel %vm1318, %v1314, inf
    %1320 = vmin.xlane.f32.xlu0 %v1319
    %v1321 = vpop.xlane.xlu0 %1320
    %v1322 = vcvt.f32.s32 %v1321
    %v1323 = vcvt.f32.s32 %v1317
    %v1324 = vshll.u32 %v1323, 16
    %v1325 = vadd.s32 %v1324, %v1322
    %v1326 = vand.u32 %v1115, 65535
    %v1327 = vshra.s32 %v1115, 16
    %v1328 = vcvt.s32.f32 %v1326
    %v1329 = vcvt.s32.f32 %v1327
    %1330 = vmin.xlane.f32.xlu0 %v1329
    %v1331 = vpop.xlane.xlu0 %1330
    %vm1332 = vcmp.eq.f32.partialorder %v1329, %v1331
    %v1333 = vsel %vm1332, %v1328, inf
    %1334 = vmin.xlane.f32.xlu0 %v1333
    %v1335 = vpop.xlane.xlu0 %1334
    %v1336 = vcvt.f32.s32 %v1335
    %v1337 = vcvt.f32.s32 %v1331
    %v1338 = vshll.u32 %v1337, 16
    %v1339 = vadd.s32 %v1338, %v1336
    %vm1340 = vcmp.eq.s32.totalorder %v714, %v1129
    %vm1341 = vcmp.eq.s32.totalorder %v714, %v1143
    %vm1342 = vcmp.eq.s32.totalorder %v714, %v1157
    %vm1343 = vcmp.eq.s32.totalorder %v714, %v1171
    %vm1344 = vcmp.eq.s32.totalorder %v714, %v1185
    %vm1345 = vcmp.eq.s32.totalorder %v714, %v1199
    %vm1346 = vcmp.eq.s32.totalorder %v714, %v1213
    %vm1347 = vcmp.eq.s32.totalorder %v714, %v1227
    %vm1348 = vcmp.eq.s32.totalorder %v714, %v1241
    %vm1349 = vcmp.eq.s32.totalorder %v714, %v1255
    %vm1350 = vcmp.eq.s32.totalorder %v714, %v1269
    %vm1351 = vcmp.eq.s32.totalorder %v714, %v1283
    %vm1352 = vcmp.eq.s32.totalorder %v714, %v1297
    %vm1353 = vcmp.eq.s32.totalorder %v714, %v1311
    %vm1354 = vcmp.eq.s32.totalorder %v714, %v1325
    %vm1355 = vcmp.eq.s32.totalorder %v714, %v1339
    %v1356 = vsub.f32 %v1053, %v733
    %v1357 = vsub.f32 %v1055, %v735
    %v1358 = vsub.f32 %v1057, %v737
    %v1359 = vsub.f32 %v1059, %v739
    %v1360 = vsub.f32 %v1061, %v741
    %v1361 = vsub.f32 %v1063, %v743
    %v1362 = vsub.f32 %v1065, %v745
    %v1363 = vsub.f32 %v1067, %v747
    %v1364 = vsub.f32 %v1069, %v749
    %v1365 = vsub.f32 %v1071, %v751
    %v1366 = vsub.f32 %v1073, %v753
    %v1367 = vsub.f32 %v1075, %v755
    %v1368 = vsub.f32 %v1077, %v757
    %v1369 = vsub.f32 %v1079, %v759
    %v1370 = vsub.f32 %v1081, %v761
    %v1371 = vsub.f32 %v1083, %v763
    %v1372 = vmul.f32 %v1356, 1.442695
    %v1373 = vpow.pop %v1372
    %v1374 = vmul.f32 %v1357, 1.442695
    %v1375 = vpow.pop %v1374
    %v1376 = vmul.f32 %v1358, 1.442695
    %v1377 = vpow.pop %v1376
    %v1378 = vmul.f32 %v1359, 1.442695
    %v1379 = vpow.pop %v1378
    %v1380 = vmul.f32 %v1360, 1.442695
    %v1381 = vpow.pop %v1380
    %v1382 = vmul.f32 %v1361, 1.442695
    %v1383 = vpow.pop %v1382
    %v1384 = vmul.f32 %v1362, 1.442695
    %v1385 = vpow.pop %v1384
    %v1386 = vmul.f32 %v1363, 1.442695
    %v1387 = vpow.pop %v1386
    %v1388 = vmul.f32 %v1364, 1.442695
    %v1389 = vpow.pop %v1388
    %v1390 = vmul.f32 %v1365, 1.442695
    %v1391 = vpow.pop %v1390
    %v1392 = vmul.f32 %v1366, 1.442695
    %v1393 = vpow.pop %v1392
    %v1394 = vmul.f32 %v1367, 1.442695
    %v1395 = vpow.pop %v1394
    %v1396 = vmul.f32 %v1368, 1.442695
    %v1397 = vpow.pop %v1396
    %v1398 = vmul.f32 %v1369, 1.442695
    %v1399 = vpow.pop %v1398
    %v1400 = vmul.f32 %v1370, 1.442695
    %v1401 = vpow.pop %v1400
    %v1402 = vmul.f32 %v1371, 1.442695
    %v1403 = vpow.pop %v1402
    %v1404 = vadd.f32 %v1373, 1.0
    %v1405 = vadd.f32 %v1375, 1.0
    %v1406 = vadd.f32 %v1377, 1.0
    %v1407 = vadd.f32 %v1379, 1.0
    %v1408 = vadd.f32 %v1381, 1.0
    %v1409 = vadd.f32 %v1383, 1.0
    %v1410 = vadd.f32 %v1385, 1.0
    %v1411 = vadd.f32 %v1387, 1.0
    %v1412 = vadd.f32 %v1389, 1.0
    %v1413 = vadd.f32 %v1391, 1.0
    %v1414 = vadd.f32 %v1393, 1.0
    %v1415 = vadd.f32 %v1395, 1.0
    %v1416 = vadd.f32 %v1397, 1.0
    %v1417 = vadd.f32 %v1399, 1.0
    %v1418 = vadd.f32 %v1401, 1.0
    %v1419 = vadd.f32 %v1403, 1.0
    %v1420 = vrcp.pop %v1404
    %v1421 = vmul.f32 1.0, %v1420
    %v1422 = vrcp.pop %v1405
    %v1423 = vmul.f32 1.0, %v1422
    %v1424 = vrcp.pop %v1406
    %v1425 = vmul.f32 1.0, %v1424
    %v1426 = vrcp.pop %v1407
    %v1427 = vmul.f32 1.0, %v1426
    %v1428 = vrcp.pop %v1408
    %v1429 = vmul.f32 1.0, %v1428
    %v1430 = vrcp.pop %v1409
    %v1431 = vmul.f32 1.0, %v1430
    %v1432 = vrcp.pop %v1410
    %v1433 = vmul.f32 1.0, %v1432
    %v1434 = vrcp.pop %v1411
    %v1435 = vmul.f32 1.0, %v1434
    %v1436 = vrcp.pop %v1412
    %v1437 = vmul.f32 1.0, %v1436
    %v1438 = vrcp.pop %v1413
    %v1439 = vmul.f32 1.0, %v1438
    %v1440 = vrcp.pop %v1414
    %v1441 = vmul.f32 1.0, %v1440
    %v1442 = vrcp.pop %v1415
    %v1443 = vmul.f32 1.0, %v1442
    %v1444 = vrcp.pop %v1416
    %v1445 = vmul.f32 1.0, %v1444
    %v1446 = vrcp.pop %v1417
    %v1447 = vmul.f32 1.0, %v1446
    %v1448 = vrcp.pop %v1418
    %v1449 = vmul.f32 1.0, %v1448
    %v1450 = vrcp.pop %v1419
    %v1451 = vmul.f32 1.0, %v1450
    %v1452 = vsel %vm1020, %v1421, 0.0
    %v1453 = vsel %vm1021, %v1423, 0.0
    %v1454 = vsel %vm1022, %v1425, 0.0
    %v1455 = vsel %vm1023, %v1427, 0.0
    %v1456 = vsel %vm1024, %v1429, 0.0
    %v1457 = vsel %vm1025, %v1431, 0.0
    %v1458 = vsel %vm1026, %v1433, 0.0
    %v1459 = vsel %vm1027, %v1435, 0.0
    %v1460 = vsel %vm1028, %v1437, 0.0
    %v1461 = vsel %vm1029, %v1439, 0.0
    %v1462 = vsel %vm1030, %v1441, 0.0
    %v1463 = vsel %vm1031, %v1443, 0.0
    %v1464 = vsel %vm1032, %v1445, 0.0
    %v1465 = vsel %vm1033, %v1447, 0.0
    %v1466 = vsel %vm1034, %v1449, 0.0
    %v1467 = vsel %vm1035, %v1451, 0.0
    %v1468 = vmul.f32 %v1373, %v1421
    %v1469 = vmul.f32 %v1375, %v1423
    %v1470 = vmul.f32 %v1377, %v1425
    %v1471 = vmul.f32 %v1379, %v1427
    %v1472 = vmul.f32 %v1381, %v1429
    %v1473 = vmul.f32 %v1383, %v1431
    %v1474 = vmul.f32 %v1385, %v1433
    %v1475 = vmul.f32 %v1387, %v1435
    %v1476 = vmul.f32 %v1389, %v1437
    %v1477 = vmul.f32 %v1391, %v1439
    %v1478 = vmul.f32 %v1393, %v1441
    %v1479 = vmul.f32 %v1395, %v1443
    %v1480 = vmul.f32 %v1397, %v1445
    %v1481 = vmul.f32 %v1399, %v1447
    %v1482 = vmul.f32 %v1401, %v1449
    %v1483 = vmul.f32 %v1403, %v1451
    %v1484 = vsel %vm1340, %v1468, 0.0
    %v1485 = vsel %vm1341, %v1469, 0.0
    %v1486 = vsel %vm1342, %v1470, 0.0
    %v1487 = vsel %vm1343, %v1471, 0.0
    %v1488 = vsel %vm1344, %v1472, 0.0
    %v1489 = vsel %vm1345, %v1473, 0.0
    %v1490 = vsel %vm1346, %v1474, 0.0
    %v1491 = vsel %vm1347, %v1475, 0.0
    %v1492 = vsel %vm1348, %v1476, 0.0
    %v1493 = vsel %vm1349, %v1477, 0.0
    %v1494 = vsel %vm1350, %v1478, 0.0
    %v1495 = vsel %vm1351, %v1479, 0.0
    %v1496 = vsel %vm1352, %v1480, 0.0
    %v1497 = vsel %vm1353, %v1481, 0.0
    %v1498 = vsel %vm1354, %v1482, 0.0
    %v1499 = vsel %vm1355, %v1483, 0.0
    %v1500 = vadd.f32 %v1452, %v1484
    %v1501 = vadd.f32 %v1453, %v1485
    %v1502 = vadd.f32 %v1454, %v1486
    %v1503 = vadd.f32 %v1455, %v1487
    %v1504 = vadd.f32 %v1456, %v1488
    %v1505 = vadd.f32 %v1457, %v1489
    %v1506 = vadd.f32 %v1458, %v1490
    %v1507 = vadd.f32 %v1459, %v1491
    %v1508 = vadd.f32 %v1460, %v1492
    %v1509 = vadd.f32 %v1461, %v1493
    %v1510 = vadd.f32 %v1462, %v1494
    %v1511 = vadd.f32 %v1463, %v1495
    %v1512 = vadd.f32 %v1464, %v1496
    %v1513 = vadd.f32 %v1465, %v1497
    %v1514 = vadd.f32 %v1466, %v1498
    %v1515 = vadd.f32 %v1467, %v1499
    %1516 = vst [vmem:[%s8] sm:$0xff] %v1500
    %1517 = vst [vmem:[%s8 + $0x8] sm:$0xff] %v1501
    %1518 = vst [vmem:[%s8 + $0x10] sm:$0xff] %v1502
    %1519 = vst [vmem:[%s8 + $0x18] sm:$0xff] %v1503
    %1520 = vst [vmem:[%s8 + $0x20] sm:$0xff] %v1504
    %1521 = vst [vmem:[%s8 + $0x28] sm:$0xff] %v1505
    %1522 = vst [vmem:[%s8 + $0x30] sm:$0xff] %v1506
    %1523 = vst [vmem:[%s8 + $0x38] sm:$0xff] %v1507
    %1524 = vst [vmem:[%s8 + $0x40] sm:$0xff] %v1508
    %1525 = vst [vmem:[%s8 + $0x48] sm:$0xff] %v1509
    %1526 = vst [vmem:[%s8 + $0x50] sm:$0xff] %v1510
    %1527 = vst [vmem:[%s8 + $0x58] sm:$0xff] %v1511
    %1528 = vst [vmem:[%s8 + $0x60] sm:$0xff] %v1512
    %1529 = vst [vmem:[%s8 + $0x68] sm:$0xff] %v1513
    %1530 = vst [vmem:[%s8 + $0x70] sm:$0xff] %v1514
    %1531 = vst [vmem:[%s8 + $0x78] sm:$0xff] %v1515
    %v1532 = vld [vmem:[%s4] sm:$0xf]
    %v1533 = vld [vmem:[%s4 + $0x4] sm:$0xf]
    %v1534 = vld [vmem:[%s4 + $0x8] sm:$0xf]
    %v1535 = vld [vmem:[%s4 + $0xc] sm:$0xf]
    %v1536 = vld [vmem:[%s4 + $0x10] sm:$0xf]
    %v1537 = vld [vmem:[%s4 + $0x14] sm:$0xf]
    %v1538 = vld [vmem:[%s4 + $0x18] sm:$0xf]
    %v1539 = vld [vmem:[%s4 + $0x1c] sm:$0xf]
    %v1540 = vld [vmem:[%s4 + $0x20] sm:$0xf]
    %v1541 = vld [vmem:[%s4 + $0x24] sm:$0xf]
    %v1542 = vld [vmem:[%s4 + $0x28] sm:$0xf]
    %v1543 = vld [vmem:[%s4 + $0x2c] sm:$0xf]
    %v1544 = vld [vmem:[%s4 + $0x30] sm:$0xf]
    %v1545 = vld [vmem:[%s4 + $0x34] sm:$0xf]
    %v1546 = vld [vmem:[%s4 + $0x38] sm:$0xf]
    %v1547 = vld [vmem:[%s4 + $0x3c] sm:$0xf]
    %v1548 = vld [vmem:[%s5] sm:$0xff]
    %v1549 = vld [vmem:[%s5 + $0x8] sm:$0xff]
    %v1550 = vld [vmem:[%s5 + $0x10] sm:$0xff]
    %v1551 = vld [vmem:[%s5 + $0x18] sm:$0xff]
    %v1552 = vld [vmem:[%s5 + $0x20] sm:$0xff]
    %v1553 = vld [vmem:[%s5 + $0x28] sm:$0xff]
    %v1554 = vld [vmem:[%s5 + $0x30] sm:$0xff]
    %v1555 = vld [vmem:[%s5 + $0x38] sm:$0xff]
    %v1556 = vld [vmem:[%s6] sm:$0xf]
    %v1558 = vlaneseq
    %v1559 = vshrl.u32 %v1558, 7
    %v1560 = vsub.s32 0, %v1559
    %v1561 = vrot.slane %v1556, %v1560
    %v1562 = vlaneseq
    %v1563 = vshrl.u32 %v1562, 7
    %v1564 = vsub.s32 1, %v1563
    %v1565 = vrot.slane %v1556, %v1564
    %v1566 = vlaneseq
    %v1567 = vshrl.u32 %v1566, 7
    %v1568 = vsub.s32 2, %v1567
    %v1569 = vrot.slane %v1556, %v1568
    %v1570 = vlaneseq
    %v1571 = vshrl.u32 %v1570, 7
    %v1572 = vsub.s32 3, %v1571
    %v1573 = vrot.slane %v1556, %v1572
    %v1594 = vunpack.c.l.b16 %v1532
    %v1595 = vunpack.c.l.b16 %v1533
    %v1596 = vunpack.c.l.b16 %v1534
    %v1597 = vunpack.c.l.b16 %v1535
    %v1598 = vunpack.c.l.b16 %v1536
    %v1599 = vunpack.c.l.b16 %v1537
    %v1600 = vunpack.c.l.b16 %v1538
    %v1601 = vunpack.c.l.b16 %v1539
    %v1602 = vunpack.c.l.b16 %v1540
    %v1603 = vunpack.c.l.b16 %v1541
    %v1604 = vunpack.c.l.b16 %v1542
    %v1605 = vunpack.c.l.b16 %v1543
    %v1606 = vunpack.c.l.b16 %v1544
    %v1607 = vunpack.c.l.b16 %v1545
    %v1608 = vunpack.c.l.b16 %v1546
    %v1609 = vunpack.c.l.b16 %v1547
    %v1610 = vpack.c.b16 %v1595, %v1594
    %v1611 = vpack.c.b16 %v1597, %v1596
    %v1612 = vpack.c.b16 %v1599, %v1598
    %v1613 = vpack.c.b16 %v1601, %v1600
    %v1614 = vpack.c.b16 %v1603, %v1602
    %v1615 = vpack.c.b16 %v1605, %v1604
    %v1616 = vpack.c.b16 %v1607, %v1606
    %v1617 = vpack.c.b16 %v1609, %v1608
    %v1626 = vunpack.c.l.b16 %v1548
    %v1627 = vunpack.c.h.b16 %v1548
    %v1628 = vunpack.c.l.b16 %v1549
    %v1629 = vunpack.c.h.b16 %v1549
    %v1630 = vunpack.c.l.b16 %v1550
    %v1631 = vunpack.c.h.b16 %v1550
    %v1632 = vunpack.c.l.b16 %v1551
    %v1633 = vunpack.c.h.b16 %v1551
    %v1634 = vunpack.c.l.b16 %v1552
    %v1635 = vunpack.c.h.b16 %v1552
    %v1636 = vunpack.c.l.b16 %v1553
    %v1637 = vunpack.c.h.b16 %v1553
    %v1638 = vunpack.c.l.b16 %v1554
    %v1639 = vunpack.c.h.b16 %v1554
    %v1640 = vunpack.c.l.b16 %v1555
    %v1641 = vunpack.c.h.b16 %v1555
    %v1642 = vpack.c.b16 %v1630, %v1626
    %v1643 = vpack.c.b16 %v1631, %v1627
    %v1644 = vpack.c.b16 %v1632, %v1628
    %v1645 = vpack.c.b16 %v1633, %v1629
    %v1646 = vpack.c.b16 %v1638, %v1634
    %v1647 = vpack.c.b16 %v1639, %v1635
    %v1648 = vpack.c.b16 %v1640, %v1636
    %v1649 = vpack.c.b16 %v1641, %v1637
    %v1659 = vsel %vm54, %v1610, 0
    %v1662 = vsel %vm54, %v1611, 0
    %v1665 = vsel %vm54, %v1612, 0
    %v1668 = vsel %vm54, %v1613, 0
    %v1671 = vsel %vm54, %v1614, 0
    %v1674 = vsel %vm54, %v1615, 0
    %v1677 = vsel %vm54, %v1616, 0
    %v1680 = vsel %vm54, %v1617, 0
    %1682 = vmatprep.subr.bf16.mxu0 %v1643
    %1683 = vmatpush1.bf16.msra.mxu0 %v1642
    %1684 = vmatprep.subr.bf16.mxu0 %v1647
    %1685 = vmatpush1.bf16.msra.mxu0 %v1646
    %1686 = vmatprep.subr.bf16.mxu0 0
    %1687 = vmatpush1.bf16.msra.mxu0 0
    %1688 = vmatprep.subr.bf16.mxu0 0
    %1689 = vmatpush1.bf16.msra.mxu0 0
    %1690 = vmatprep.subr.bf16.mxu0 0
    %1691 = vmatpush1.bf16.msra.mxu0 0
    %1692 = vmatprep.subr.bf16.mxu0 0
    %1693 = vmatpush1.bf16.msra.mxu0 0
    %1694 = vmatprep.subr.bf16.mxu0 0
    %1695 = vmatpush1.bf16.msra.mxu0 0
    %1696 = vmatprep.subr.bf16.mxu0 0
    %1697 = vmatpush1.bf16.msra.mxu0 0
    %1698 = vmatprep.subr.bf16.mxu0 0
    %1699 = vmatpush1.bf16.msra.mxu0 0
    %1700 = vmatprep.subr.bf16.mxu0 0
    %1701 = vmatpush1.bf16.msra.mxu0 0
    %1702 = vmatprep.subr.bf16.mxu0 0
    %1703 = vmatpush1.bf16.msra.mxu0 0
    %1704 = vmatprep.subr.bf16.mxu0 0
    %1705 = vmatpush1.bf16.msra.mxu0 0
    %1706 = vmatprep.subr.bf16.mxu0 0
    %1707 = vmatpush1.bf16.msra.mxu0 0
    %1708 = vmatprep.subr.bf16.mxu0 0
    %1709 = vmatpush1.bf16.msra.mxu0 0
    %1710 = vmatprep.subr.bf16.mxu0 0
    %1711 = vmatpush1.bf16.msra.mxu0 0
    %1712 = vmatprep.subr.bf16.mxu0 0
    %1713 = vmatpush1.bf16.msra.mxu0 0
    %1714 = vmatprep.mubr.bf16.mxu0 0
    %1715 = vmatmul.mubr.bf16.gmra.mrb[0].mxu0 %v1659
    %v1716 = vpop.f32.mrb[0].mxu0
    %v1717 = vadd.f32 %v1561, %v1716
    %v1718 = vpop.f32.mrb[0].mxu0
    %v1719 = vadd.f32 %v1565, %v1718
    %v1720 = vpop.f32.mrb[0].mxu0
    %v1721 = vadd.f32 %v1561, %v1720
    %v1722 = vpop.f32.mrb[0].mxu0
    %v1723 = vadd.f32 %v1565, %v1722
    %1724 = vmatprep.mubr.bf16.mxu0 0
    %1725 = vmatmul.mubr.bf16.gmra.mrb[0].mxu0 %v1662
    %v1726 = vpop.f32.mrb[0].mxu0
    %v1727 = vadd.f32 %v1561, %v1726
    %v1728 = vpop.f32.mrb[0].mxu0
    %v1729 = vadd.f32 %v1565, %v1728
    %v1730 = vpop.f32.mrb[0].mxu0
    %v1731 = vadd.f32 %v1561, %v1730
    %v1732 = vpop.f32.mrb[0].mxu0
    %v1733 = vadd.f32 %v1565, %v1732
    %1734 = vmatprep.mubr.bf16.mxu0 0
    %1735 = vmatmul.mubr.bf16.gmra.mrb[0].mxu0 %v1665
    %v1736 = vpop.f32.mrb[0].mxu0
    %v1737 = vadd.f32 %v1561, %v1736
    %v1738 = vpop.f32.mrb[0].mxu0
    %v1739 = vadd.f32 %v1565, %v1738
    %v1740 = vpop.f32.mrb[0].mxu0
    %v1741 = vadd.f32 %v1561, %v1740
    %v1742 = vpop.f32.mrb[0].mxu0
    %v1743 = vadd.f32 %v1565, %v1742
    %1744 = vmatprep.mubr.bf16.mxu0 0
    %1745 = vmatmul.mubr.bf16.gmra.mrb[0].mxu0 %v1668
    %v1746 = vpop.f32.mrb[0].mxu0
    %v1747 = vadd.f32 %v1561, %v1746
    %v1748 = vpop.f32.mrb[0].mxu0
    %v1749 = vadd.f32 %v1565, %v1748
    %v1750 = vpop.f32.mrb[0].mxu0
    %v1751 = vadd.f32 %v1561, %v1750
    %v1752 = vpop.f32.mrb[0].mxu0
    %v1753 = vadd.f32 %v1565, %v1752
    %1754 = vmatprep.mubr.bf16.mxu0 0
    %1755 = vmatmul.mubr.bf16.gmra.mrb[0].mxu0 %v1671
    %v1756 = vpop.f32.mrb[0].mxu0
    %v1757 = vadd.f32 %v1561, %v1756
    %v1758 = vpop.f32.mrb[0].mxu0
    %v1759 = vadd.f32 %v1565, %v1758
    %v1760 = vpop.f32.mrb[0].mxu0
    %v1761 = vadd.f32 %v1561, %v1760
    %v1762 = vpop.f32.mrb[0].mxu0
    %v1763 = vadd.f32 %v1565, %v1762
    %1764 = vmatprep.mubr.bf16.mxu0 0
    %1765 = vmatmul.mubr.bf16.gmra.mrb[0].mxu0 %v1674
    %v1766 = vpop.f32.mrb[0].mxu0
    %v1767 = vadd.f32 %v1561, %v1766
    %v1768 = vpop.f32.mrb[0].mxu0
    %v1769 = vadd.f32 %v1565, %v1768
    %v1770 = vpop.f32.mrb[0].mxu0
    %v1771 = vadd.f32 %v1561, %v1770
    %v1772 = vpop.f32.mrb[0].mxu0
    %v1773 = vadd.f32 %v1565, %v1772
    %1774 = vmatprep.mubr.bf16.mxu0 0
    %1775 = vmatmul.mubr.bf16.gmra.mrb[0].mxu0 %v1677
    %v1776 = vpop.f32.mrb[0].mxu0
    %v1777 = vadd.f32 %v1561, %v1776
    %v1778 = vpop.f32.mrb[0].mxu0
    %v1779 = vadd.f32 %v1565, %v1778
    %v1780 = vpop.f32.mrb[0].mxu0
    %v1781 = vadd.f32 %v1561, %v1780
    %v1782 = vpop.f32.mrb[0].mxu0
    %v1783 = vadd.f32 %v1565, %v1782
    %1784 = vmatprep.mubr.bf16.mxu0 0
    %1785 = vmatmul.mubr.bf16.gmra.mrb[0].mxu0 %v1680
    %v1786 = vpop.f32.mrb[0].mxu0
    %v1787 = vadd.f32 %v1561, %v1786
    %v1788 = vpop.f32.mrb[0].mxu0
    %v1789 = vadd.f32 %v1565, %v1788
    %v1790 = vpop.f32.mrb[0].mxu0
    %v1791 = vadd.f32 %v1561, %v1790
    %v1792 = vpop.f32.mrb[0].mxu0
    %v1793 = vadd.f32 %v1565, %v1792
    %1794 = vdwg.mxu0
    %1795 = vmatprep.subr.bf16.mxu0 %v1645
    %1796 = vmatpush1.bf16.msra.mxu0 %v1644
    %1797 = vmatprep.subr.bf16.mxu0 %v1649
    %1798 = vmatpush1.bf16.msra.mxu0 %v1648
    %1799 = vmatprep.subr.bf16.mxu0 0
    %1800 = vmatpush1.bf16.msra.mxu0 0
    %1801 = vmatprep.subr.bf16.mxu0 0
    %1802 = vmatpush1.bf16.msra.mxu0 0
    %1803 = vmatprep.subr.bf16.mxu0 0
    %1804 = vmatpush1.bf16.msra.mxu0 0
    %1805 = vmatprep.subr.bf16.mxu0 0
    %1806 = vmatpush1.bf16.msra.mxu0 0
    %1807 = vmatprep.subr.bf16.mxu0 0
    %1808 = vmatpush1.bf16.msra.mxu0 0
    %1809 = vmatprep.subr.bf16.mxu0 0
    %1810 = vmatpush1.bf16.msra.mxu0 0
    %1811 = vmatprep.subr.bf16.mxu0 0
    %1812 = vmatpush1.bf16.msra.mxu0 0
    %1813 = vmatprep.subr.bf16.mxu0 0
    %1814 = vmatpush1.bf16.msra.mxu0 0
    %1815 = vmatprep.subr.bf16.mxu0 0
    %1816 = vmatpush1.bf16.msra.mxu0 0
    %1817 = vmatprep.subr.bf16.mxu0 0
    %1818 = vmatpush1.bf16.msra.mxu0 0
    %1819 = vmatprep.subr.bf16.mxu0 0
    %1820 = vmatpush1.bf16.msra.mxu0 0
    %1821 = vmatprep.subr.bf16.mxu0 0
    %1822 = vmatpush1.bf16.msra.mxu0 0
    %1823 = vmatprep.subr.bf16.mxu0 0
    %1824 = vmatpush1.bf16.msra.mxu0 0
    %1825 = vmatprep.subr.bf16.mxu0 0
    %1826 = vmatpush1.bf16.msra.mxu0 0
    %1827 = vmatprep.mubr.bf16.mxu0 0
    %1828 = vmatmul.mubr.bf16.gmra.mrb[0].mxu0 %v1659
    %v1829 = vpop.f32.mrb[0].mxu0
    %v1830 = vadd.f32 %v1569, %v1829
    %v1831 = vpop.f32.mrb[0].mxu0
    %v1832 = vadd.f32 %v1573, %v1831
    %v1833 = vpop.f32.mrb[0].mxu0
    %v1834 = vadd.f32 %v1569, %v1833
    %v1835 = vpop.f32.mrb[0].mxu0
    %v1836 = vadd.f32 %v1573, %v1835
    %1837 = vmatprep.mubr.bf16.mxu0 0
    %1838 = vmatmul.mubr.bf16.gmra.mrb[0].mxu0 %v1662
    %v1839 = vpop.f32.mrb[0].mxu0
    %v1840 = vadd.f32 %v1569, %v1839
    %v1841 = vpop.f32.mrb[0].mxu0
    %v1842 = vadd.f32 %v1573, %v1841
    %v1843 = vpop.f32.mrb[0].mxu0
    %v1844 = vadd.f32 %v1569, %v1843
    %v1845 = vpop.f32.mrb[0].mxu0
    %v1846 = vadd.f32 %v1573, %v1845
    %1847 = vmatprep.mubr.bf16.mxu0 0
    %1848 = vmatmul.mubr.bf16.gmra.mrb[0].mxu0 %v1665
    %v1849 = vpop.f32.mrb[0].mxu0
    %v1850 = vadd.f32 %v1569, %v1849
    %v1851 = vpop.f32.mrb[0].mxu0
    %v1852 = vadd.f32 %v1573, %v1851
    %v1853 = vpop.f32.mrb[0].mxu0
    %v1854 = vadd.f32 %v1569, %v1853
    %v1855 = vpop.f32.mrb[0].mxu0
    %v1856 = vadd.f32 %v1573, %v1855
    %1857 = vmatprep.mubr.bf16.mxu0 0
    %1858 = vmatmul.mubr.bf16.gmra.mrb[0].mxu0 %v1668
    %v1859 = vpop.f32.mrb[0].mxu0
    %v1860 = vadd.f32 %v1569, %v1859
    %v1861 = vpop.f32.mrb[0].mxu0
    %v1862 = vadd.f32 %v1573, %v1861
    %v1863 = vpop.f32.mrb[0].mxu0
    %v1864 = vadd.f32 %v1569, %v1863
    %v1865 = vpop.f32.mrb[0].mxu0
    %v1866 = vadd.f32 %v1573, %v1865
    %1867 = vmatprep.mubr.bf16.mxu0 0
    %1868 = vmatmul.mubr.bf16.gmra.mrb[0].mxu0 %v1671
    %v1869 = vpop.f32.mrb[0].mxu0
    %v1870 = vadd.f32 %v1569, %v1869
    %v1871 = vpop.f32.mrb[0].mxu0
    %v1872 = vadd.f32 %v1573, %v1871
    %v1873 = vpop.f32.mrb[0].mxu0
    %v1874 = vadd.f32 %v1569, %v1873
    %v1875 = vpop.f32.mrb[0].mxu0
    %v1876 = vadd.f32 %v1573, %v1875
    %1877 = vmatprep.mubr.bf16.mxu0 0
    %1878 = vmatmul.mubr.bf16.gmra.mrb[0].mxu0 %v1674
    %v1879 = vpop.f32.mrb[0].mxu0
    %v1880 = vadd.f32 %v1569, %v1879
    %v1881 = vpop.f32.mrb[0].mxu0
    %v1882 = vadd.f32 %v1573, %v1881
    %v1883 = vpop.f32.mrb[0].mxu0
    %v1884 = vadd.f32 %v1569, %v1883
    %v1885 = vpop.f32.mrb[0].mxu0
    %v1886 = vadd.f32 %v1573, %v1885
    %1887 = vmatprep.mubr.bf16.mxu0 0
    %1888 = vmatmul.mubr.bf16.gmra.mrb[0].mxu0 %v1677
    %v1889 = vpop.f32.mrb[0].mxu0
    %v1890 = vadd.f32 %v1569, %v1889
    %v1891 = vpop.f32.mrb[0].mxu0
    %v1892 = vadd.f32 %v1573, %v1891
    %v1893 = vpop.f32.mrb[0].mxu0
    %v1894 = vadd.f32 %v1569, %v1893
    %v1895 = vpop.f32.mrb[0].mxu0
    %v1896 = vadd.f32 %v1573, %v1895
    %1897 = vmatprep.mubr.bf16.mxu0 0
    %1898 = vmatmul.mubr.bf16.gmra.mrb[0].mxu0 %v1680
    %v1899 = vpop.f32.mrb[0].mxu0
    %v1900 = vadd.f32 %v1569, %v1899
    %v1901 = vpop.f32.mrb[0].mxu0
    %v1902 = vadd.f32 %v1573, %v1901
    %v1903 = vpop.f32.mrb[0].mxu0
    %v1904 = vadd.f32 %v1569, %v1903
    %v1905 = vpop.f32.mrb[0].mxu0
    %v1906 = vadd.f32 %v1573, %v1905
    %1907 = vdwg.mxu0
    %1909 = vset.pattern.permute.xlu0 0
    %1910 = vperm.xlu0 %1909, %v1500
    %v1911 = vpop.permute.xlu0 %1910
    %1914 = vset.pattern.permute.xlu0 0
    %1915 = vperm.xlu0 %1914, %v1501
    %v1916 = vpop.permute.xlu0 %1915
    %1919 = vset.pattern.permute.xlu0 0
    %1920 = vperm.xlu0 %1919, %v1502
    %v1921 = vpop.permute.xlu0 %1920
    %1924 = vset.pattern.permute.xlu0 0
    %1925 = vperm.xlu0 %1924, %v1503
    %v1926 = vpop.permute.xlu0 %1925
    %1929 = vset.pattern.permute.xlu0 0
    %1930 = vperm.xlu0 %1929, %v1504
    %v1931 = vpop.permute.xlu0 %1930
    %1934 = vset.pattern.permute.xlu0 0
    %1935 = vperm.xlu0 %1934, %v1505
    %v1936 = vpop.permute.xlu0 %1935
    %1939 = vset.pattern.permute.xlu0 0
    %1940 = vperm.xlu0 %1939, %v1506
    %v1941 = vpop.permute.xlu0 %1940
    %1944 = vset.pattern.permute.xlu0 0
    %1945 = vperm.xlu0 %1944, %v1507
    %v1946 = vpop.permute.xlu0 %1945
    %1949 = vset.pattern.permute.xlu0 0
    %1950 = vperm.xlu0 %1949, %v1508
    %v1951 = vpop.permute.xlu0 %1950
    %1954 = vset.pattern.permute.xlu0 0
    %1955 = vperm.xlu0 %1954, %v1509
    %v1956 = vpop.permute.xlu0 %1955
    %1959 = vset.pattern.permute.xlu0 0
    %1960 = vperm.xlu0 %1959, %v1510
    %v1961 = vpop.permute.xlu0 %1960
    %1964 = vset.pattern.permute.xlu0 0
    %1965 = vperm.xlu0 %1964, %v1511
    %v1966 = vpop.permute.xlu0 %1965
    %1969 = vset.pattern.permute.xlu0 0
    %1970 = vperm.xlu0 %1969, %v1512
    %v1971 = vpop.permute.xlu0 %1970
    %1974 = vset.pattern.permute.xlu0 0
    %1975 = vperm.xlu0 %1974, %v1513
    %v1976 = vpop.permute.xlu0 %1975
    %1979 = vset.pattern.permute.xlu0 0
    %1980 = vperm.xlu0 %1979, %v1514
    %v1981 = vpop.permute.xlu0 %1980
    %1984 = vset.pattern.permute.xlu0 0
    %1985 = vperm.xlu0 %1984, %v1515
    %v1986 = vpop.permute.xlu0 %1985
    %v1988 = vmul.f32 %v1911, %v1717
    %v1989 = vmul.f32 %v1916, %v1721
    %v1990 = vmul.f32 %v1921, %v1727
    %v1991 = vmul.f32 %v1926, %v1731
    %v1992 = vmul.f32 %v1931, %v1737
    %v1993 = vmul.f32 %v1936, %v1741
    %v1994 = vmul.f32 %v1941, %v1747
    %v1995 = vmul.f32 %v1946, %v1751
    %v1996 = vmul.f32 %v1951, %v1757
    %v1997 = vmul.f32 %v1956, %v1761
    %v1998 = vmul.f32 %v1961, %v1767
    %v1999 = vmul.f32 %v1966, %v1771
    %v2000 = vmul.f32 %v1971, %v1777
    %v2001 = vmul.f32 %v1976, %v1781
    %v2002 = vmul.f32 %v1981, %v1787
    %v2003 = vmul.f32 %v1986, %v1791
    %2004 = vset.pattern.permute.xlu0 1
    %2005 = vperm.xlu0 %2004, %v1500
    %v2006 = vpop.permute.xlu0 %2005
    %2008 = vset.pattern.permute.xlu0 1
    %2009 = vperm.xlu0 %2008, %v1501
    %v2010 = vpop.permute.xlu0 %2009
    %2012 = vset.pattern.permute.xlu0 1
    %2013 = vperm.xlu0 %2012, %v1502
    %v2014 = vpop.permute.xlu0 %2013
    %2016 = vset.pattern.permute.xlu0 1
    %2017 = vperm.xlu0 %2016, %v1503
    %v2018 = vpop.permute.xlu0 %2017
    %2020 = vset.pattern.permute.xlu0 1
    %2021 = vperm.xlu0 %2020, %v1504
    %v2022 = vpop.permute.xlu0 %2021
    %2024 = vset.pattern.permute.xlu0 1
    %2025 = vperm.xlu0 %2024, %v1505
    %v2026 = vpop.permute.xlu0 %2025
    %2028 = vset.pattern.permute.xlu0 1
    %2029 = vperm.xlu0 %2028, %v1506
    %v2030 = vpop.permute.xlu0 %2029
    %2032 = vset.pattern.permute.xlu0 1
    %2033 = vperm.xlu0 %2032, %v1507
    %v2034 = vpop.permute.xlu0 %2033
    %2036 = vset.pattern.permute.xlu0 1
    %2037 = vperm.xlu0 %2036, %v1508
    %v2038 = vpop.permute.xlu0 %2037
    %2040 = vset.pattern.permute.xlu0 1
    %2041 = vperm.xlu0 %2040, %v1509
    %v2042 = vpop.permute.xlu0 %2041
    %2044 = vset.pattern.permute.xlu0 1
    %2045 = vperm.xlu0 %2044, %v1510
    %v2046 = vpop.permute.xlu0 %2045
    %2048 = vset.pattern.permute.xlu0 1
    %2049 = vperm.xlu0 %2048, %v1511
    %v2050 = vpop.permute.xlu0 %2049
    %2052 = vset.pattern.permute.xlu0 1
    %2053 = vperm.xlu0 %2052, %v1512
    %v2054 = vpop.permute.xlu0 %2053
    %2056 = vset.pattern.permute.xlu0 1
    %2057 = vperm.xlu0 %2056, %v1513
    %v2058 = vpop.permute.xlu0 %2057
    %2060 = vset.pattern.permute.xlu0 1
    %2061 = vperm.xlu0 %2060, %v1514
    %v2062 = vpop.permute.xlu0 %2061
    %2064 = vset.pattern.permute.xlu0 1
    %2065 = vperm.xlu0 %2064, %v1515
    %v2066 = vpop.permute.xlu0 %2065
    %v2068 = vmul.f32 %v2006, %v1719
    %v2069 = vmul.f32 %v2010, %v1723
    %v2070 = vmul.f32 %v2014, %v1729
    %v2071 = vmul.f32 %v2018, %v1733
    %v2072 = vmul.f32 %v2022, %v1739
    %v2073 = vmul.f32 %v2026, %v1743
    %v2074 = vmul.f32 %v2030, %v1749
    %v2075 = vmul.f32 %v2034, %v1753
    %v2076 = vmul.f32 %v2038, %v1759
    %v2077 = vmul.f32 %v2042, %v1763
    %v2078 = vmul.f32 %v2046, %v1769
    %v2079 = vmul.f32 %v2050, %v1773
    %v2080 = vmul.f32 %v2054, %v1779
    %v2081 = vmul.f32 %v2058, %v1783
    %v2082 = vmul.f32 %v2062, %v1789
    %v2083 = vmul.f32 %v2066, %v1793
    %v2084 = vadd.f32 %v1988, %v2068
    %v2085 = vadd.f32 %v1989, %v2069
    %v2086 = vadd.f32 %v1990, %v2070
    %v2087 = vadd.f32 %v1991, %v2071
    %v2088 = vadd.f32 %v1992, %v2072
    %v2089 = vadd.f32 %v1993, %v2073
    %v2090 = vadd.f32 %v1994, %v2074
    %v2091 = vadd.f32 %v1995, %v2075
    %v2092 = vadd.f32 %v1996, %v2076
    %v2093 = vadd.f32 %v1997, %v2077
    %v2094 = vadd.f32 %v1998, %v2078
    %v2095 = vadd.f32 %v1999, %v2079
    %v2096 = vadd.f32 %v2000, %v2080
    %v2097 = vadd.f32 %v2001, %v2081
    %v2098 = vadd.f32 %v2002, %v2082
    %v2099 = vadd.f32 %v2003, %v2083
    %2100 = vset.pattern.permute.xlu0 2
    %2101 = vperm.xlu0 %2100, %v1500
    %v2102 = vpop.permute.xlu0 %2101
    %2104 = vset.pattern.permute.xlu0 2
    %2105 = vperm.xlu0 %2104, %v1501
    %v2106 = vpop.permute.xlu0 %2105
    %2108 = vset.pattern.permute.xlu0 2
    %2109 = vperm.xlu0 %2108, %v1502
    %v2110 = vpop.permute.xlu0 %2109
    %2112 = vset.pattern.permute.xlu0 2
    %2113 = vperm.xlu0 %2112, %v1503
    %v2114 = vpop.permute.xlu0 %2113
    %2116 = vset.pattern.permute.xlu0 2
    %2117 = vperm.xlu0 %2116, %v1504
    %v2118 = vpop.permute.xlu0 %2117
    %2120 = vset.pattern.permute.xlu0 2
    %2121 = vperm.xlu0 %2120, %v1505
    %v2122 = vpop.permute.xlu0 %2121
    %2124 = vset.pattern.permute.xlu0 2
    %2125 = vperm.xlu0 %2124, %v1506
    %v2126 = vpop.permute.xlu0 %2125
    %2128 = vset.pattern.permute.xlu0 2
    %2129 = vperm.xlu0 %2128, %v1507
    %v2130 = vpop.permute.xlu0 %2129
    %2132 = vset.pattern.permute.xlu0 2
    %2133 = vperm.xlu0 %2132, %v1508
    %v2134 = vpop.permute.xlu0 %2133
    %2136 = vset.pattern.permute.xlu0 2
    %2137 = vperm.xlu0 %2136, %v1509
    %v2138 = vpop.permute.xlu0 %2137
    %2140 = vset.pattern.permute.xlu0 2
    %2141 = vperm.xlu0 %2140, %v1510
    %v2142 = vpop.permute.xlu0 %2141
    %2144 = vset.pattern.permute.xlu0 2
    %2145 = vperm.xlu0 %2144, %v1511
    %v2146 = vpop.permute.xlu0 %2145
    %2148 = vset.pattern.permute.xlu0 2
    %2149 = vperm.xlu0 %2148, %v1512
    %v2150 = vpop.permute.xlu0 %2149
    %2152 = vset.pattern.permute.xlu0 2
    %2153 = vperm.xlu0 %2152, %v1513
    %v2154 = vpop.permute.xlu0 %2153
    %2156 = vset.pattern.permute.xlu0 2
    %2157 = vperm.xlu0 %2156, %v1514
    %v2158 = vpop.permute.xlu0 %2157
    %2160 = vset.pattern.permute.xlu0 2
    %2161 = vperm.xlu0 %2160, %v1515
    %v2162 = vpop.permute.xlu0 %2161
    %v2164 = vmul.f32 %v2102, %v1830
    %v2165 = vmul.f32 %v2106, %v1834
    %v2166 = vmul.f32 %v2110, %v1840
    %v2167 = vmul.f32 %v2114, %v1844
    %v2168 = vmul.f32 %v2118, %v1850
    %v2169 = vmul.f32 %v2122, %v1854
    %v2170 = vmul.f32 %v2126, %v1860
    %v2171 = vmul.f32 %v2130, %v1864
    %v2172 = vmul.f32 %v2134, %v1870
    %v2173 = vmul.f32 %v2138, %v1874
    %v2174 = vmul.f32 %v2142, %v1880
    %v2175 = vmul.f32 %v2146, %v1884
    %v2176 = vmul.f32 %v2150, %v1890
    %v2177 = vmul.f32 %v2154, %v1894
    %v2178 = vmul.f32 %v2158, %v1900
    %v2179 = vmul.f32 %v2162, %v1904
    %v2180 = vadd.f32 %v2084, %v2164
    %v2181 = vadd.f32 %v2085, %v2165
    %v2182 = vadd.f32 %v2086, %v2166
    %v2183 = vadd.f32 %v2087, %v2167
    %v2184 = vadd.f32 %v2088, %v2168
    %v2185 = vadd.f32 %v2089, %v2169
    %v2186 = vadd.f32 %v2090, %v2170
    %v2187 = vadd.f32 %v2091, %v2171
    %v2188 = vadd.f32 %v2092, %v2172
    %v2189 = vadd.f32 %v2093, %v2173
    %v2190 = vadd.f32 %v2094, %v2174
    %v2191 = vadd.f32 %v2095, %v2175
    %v2192 = vadd.f32 %v2096, %v2176
    %v2193 = vadd.f32 %v2097, %v2177
    %v2194 = vadd.f32 %v2098, %v2178
    %v2195 = vadd.f32 %v2099, %v2179
    %2196 = vset.pattern.permute.xlu0 3
    %2197 = vperm.xlu0 %2196, %v1500
    %v2198 = vpop.permute.xlu0 %2197
    %2200 = vset.pattern.permute.xlu0 3
    %2201 = vperm.xlu0 %2200, %v1501
    %v2202 = vpop.permute.xlu0 %2201
    %2204 = vset.pattern.permute.xlu0 3
    %2205 = vperm.xlu0 %2204, %v1502
    %v2206 = vpop.permute.xlu0 %2205
    %2208 = vset.pattern.permute.xlu0 3
    %2209 = vperm.xlu0 %2208, %v1503
    %v2210 = vpop.permute.xlu0 %2209
    %2212 = vset.pattern.permute.xlu0 3
    %2213 = vperm.xlu0 %2212, %v1504
    %v2214 = vpop.permute.xlu0 %2213
    %2216 = vset.pattern.permute.xlu0 3
    %2217 = vperm.xlu0 %2216, %v1505
    %v2218 = vpop.permute.xlu0 %2217
    %2220 = vset.pattern.permute.xlu0 3
    %2221 = vperm.xlu0 %2220, %v1506
    %v2222 = vpop.permute.xlu0 %2221
    %2224 = vset.pattern.permute.xlu0 3
    %2225 = vperm.xlu0 %2224, %v1507
    %v2226 = vpop.permute.xlu0 %2225
    %2228 = vset.pattern.permute.xlu0 3
    %2229 = vperm.xlu0 %2228, %v1508
    %v2230 = vpop.permute.xlu0 %2229
    %2232 = vset.pattern.permute.xlu0 3
    %2233 = vperm.xlu0 %2232, %v1509
    %v2234 = vpop.permute.xlu0 %2233
    %2236 = vset.pattern.permute.xlu0 3
    %2237 = vperm.xlu0 %2236, %v1510
    %v2238 = vpop.permute.xlu0 %2237
    %2240 = vset.pattern.permute.xlu0 3
    %2241 = vperm.xlu0 %2240, %v1511
    %v2242 = vpop.permute.xlu0 %2241
    %2244 = vset.pattern.permute.xlu0 3
    %2245 = vperm.xlu0 %2244, %v1512
    %v2246 = vpop.permute.xlu0 %2245
    %2248 = vset.pattern.permute.xlu0 3
    %2249 = vperm.xlu0 %2248, %v1513
    %v2250 = vpop.permute.xlu0 %2249
    %2252 = vset.pattern.permute.xlu0 3
    %2253 = vperm.xlu0 %2252, %v1514
    %v2254 = vpop.permute.xlu0 %2253
    %2256 = vset.pattern.permute.xlu0 3
    %2257 = vperm.xlu0 %2256, %v1515
    %v2258 = vpop.permute.xlu0 %2257
    %v2260 = vmul.f32 %v2198, %v1832
    %v2261 = vmul.f32 %v2202, %v1836
    %v2262 = vmul.f32 %v2206, %v1842
    %v2263 = vmul.f32 %v2210, %v1846
    %v2264 = vmul.f32 %v2214, %v1852
    %v2265 = vmul.f32 %v2218, %v1856
    %v2266 = vmul.f32 %v2222, %v1862
    %v2267 = vmul.f32 %v2226, %v1866
    %v2268 = vmul.f32 %v2230, %v1872
    %v2269 = vmul.f32 %v2234, %v1876
    %v2270 = vmul.f32 %v2238, %v1882
    %v2271 = vmul.f32 %v2242, %v1886
    %v2272 = vmul.f32 %v2246, %v1892
    %v2273 = vmul.f32 %v2250, %v1896
    %v2274 = vmul.f32 %v2254, %v1902
    %v2275 = vmul.f32 %v2258, %v1906
    %v2276 = vadd.f32 %v2180, %v2260
    %v2277 = vadd.f32 %v2181, %v2261
    %v2278 = vadd.f32 %v2182, %v2262
    %v2279 = vadd.f32 %v2183, %v2263
    %v2280 = vadd.f32 %v2184, %v2264
    %v2281 = vadd.f32 %v2185, %v2265
    %v2282 = vadd.f32 %v2186, %v2266
    %v2283 = vadd.f32 %v2187, %v2267
    %v2284 = vadd.f32 %v2188, %v2268
    %v2285 = vadd.f32 %v2189, %v2269
    %v2286 = vadd.f32 %v2190, %v2270
    %v2287 = vadd.f32 %v2191, %v2271
    %v2288 = vadd.f32 %v2192, %v2272
    %v2289 = vadd.f32 %v2193, %v2273
    %v2290 = vadd.f32 %v2194, %v2274
    %v2291 = vadd.f32 %v2195, %v2275
    %2292 = vst [vmem:[#allocation2] sm:$0xff] %v2276
    %2293 = vst [vmem:[#allocation2 + $0x8] sm:$0xff] %v2277
    %2294 = vst [vmem:[#allocation2 + $0x10] sm:$0xff] %v2278
    %2295 = vst [vmem:[#allocation2 + $0x18] sm:$0xff] %v2279
    %2296 = vst [vmem:[#allocation2 + $0x20] sm:$0xff] %v2280
    %2297 = vst [vmem:[#allocation2 + $0x28] sm:$0xff] %v2281
    %2298 = vst [vmem:[#allocation2 + $0x30] sm:$0xff] %v2282
    %2299 = vst [vmem:[#allocation2 + $0x38] sm:$0xff] %v2283
    %2300 = vst [vmem:[#allocation2 + $0x40] sm:$0xff] %v2284
    %2301 = vst [vmem:[#allocation2 + $0x48] sm:$0xff] %v2285
    %2302 = vst [vmem:[#allocation2 + $0x50] sm:$0xff] %v2286
    %2303 = vst [vmem:[#allocation2 + $0x58] sm:$0xff] %v2287
    %2304 = vst [vmem:[#allocation2 + $0x60] sm:$0xff] %v2288
    %2305 = vst [vmem:[#allocation2 + $0x68] sm:$0xff] %v2289
    %2306 = vst [vmem:[#allocation2 + $0x70] sm:$0xff] %v2290
    %2307 = vst [vmem:[#allocation2 + $0x78] sm:$0xff] %v2291
    // Predicated region
    $region30: #{forward.1} parent=1 // pred_check
      _
    $region31: #{forward.1} parent=1 // pred_check_branch
      %2309 = sbr.rel (0) target = $region33
    $region32: #{forward.1} parent=1 // pred_region
      %s2311 = ssub.s32 2048, 2048
      %2312 = vsyncadd [#allocation3], %s2311
      %s2313 = sshll.u32 [#allocation2], 4
      %s2314 = int_to_ptr.vmem [resolvable:$true] %s2313
      %2319 = dma.vmem_to_hbm [thread:$0]  %s2314, 2048, %s7, [#allocation3], 128, 128, 8
    $region33: #{forward.1} parent=1 // pred_fallthru
      _
    // Predicated region
    $region34: #{forward.1} parent=1 // pred_check
      _
    $region35: #{forward.1} parent=1 // pred_check_branch
      %2321 = sbr.rel (0) target = $region37
    $region36: #{forward.1} parent=1 // pred_region
      _
    $region37: #{forward.1} parent=1 // pred_fallthru
      _
    // Predicated region
    $region38: #{forward.1} parent=1 // pred_check
      _
    $region39: #{forward.1} parent=1 // pred_check_branch
      %2323 = sbr.rel (0) target = $region41
    $region40: #{forward.1} parent=1 // pred_region
      %2324 = dma.done [#allocation3], 2048
    $region41: #{forward.1} parent=1 // pred_fallthru
      _
    // Predicated region
    $region42: #{forward.1} parent=1 // pred_check
      _
    $region43: #{forward.1} parent=1 // pred_check_branch
      %2326 = sbr.rel (0) target = $region45
    $region44: #{forward.1} parent=1 // pred_region
      _
    $region45: #{forward.1} parent=1 // pred_fallthru
      _
    %2327 = vsyncpa [#allocation3], 1

</llo_original>
